<compile_context>
chip_gen: v7x
topology: tpu7x:2x2x1
jax: 0.10.0
libtpu: 0.0.40
codegen_flags: <defaults>
</compile_context>

<pallas_src>
import jax
import jax.numpy as jnp
from jax import lax
from jax.experimental import pallas as pl
from jax.experimental.pallas import tpu as pltpu


# ----------------------------- configuration -------------------------------
EDGE_DIM = 6          # raw edge feature columns used by forward()
HIDDEN = 32           # hidden_dim (small, consistent with the module structure)
OUTPUT = 16           # output_dim
H4 = HIDDEN // 4      # per-sub-encoder embedding width (8)
H2 = HIDDEN // 2      # attention hidden width (16)
COMB = 4 * H4 + 2     # combined feature dim = hidden_dim + 2 (34)
NUM_TX_TYPES = 10
NUM_DIRECTIONS = 2
BN_EPS = 1e-5
XROWS = 8             # x^T padded to 8 sublanes


def _align16(x):
    return (x + 15) // 16 * 16


def _round_up(x, m):
    return (x + m - 1) // m * m


# fused front-end RHS row layout (one K=32 matmul replaces 8 tiny matmuls)
C_TX = 0                               # rows  0..9  : one-hot(tx_type)
C_DIR = C_TX + NUM_TX_TYPES            # rows 10..11 : one-hot(direction)
C_AH = C_DIR + NUM_DIRECTIONS          # rows 12..19 : relu(aw1*amount + ab1)
C_TH = C_AH + H4                       # rows 20..27 : relu(tw1*time   + tb1)
C_FEE = C_TH + H4                      # row  28     : fee
C_BH = C_FEE + 1                       # row  29     : block_height
RHS_ROWS = _align16(C_BH + 1)          # 32 (rows 30..31 are zero padding)

# weight slab row layout (16-sublane aligned so bf16 packing stays clean)
WR_M = 0                               # M (fused front-end)   [HIDDEN, 32]
WR_W1 = _align16(WR_M + HIDDEN)        # W1'^T (BN0 folded)    [HIDDEN, HIDDEN]
WR_W2 = _align16(WR_W1 + HIDDEN)       # W2'^T (BN1 folded)    [OUTPUT, HIDDEN]
WR_WA1 = _align16(WR_W2 + OUTPUT)      # WA1^T                 [H2, OUTPUT]
WSLAB_ROWS = _align16(WR_WA1 + H2)     # 96
WSLAB_COLS = max(RHS_ROWS, HIDDEN)     # 32

VSLAB_ROWS = max(RHS_ROWS, HIDDEN)     # 32
VSLAB_COLS = 16                        # 9 columns used (f32 vector constants)

FLOPS_PER_ROW = (2 * (RHS_ROWS * HIDDEN + HIDDEN * HIDDEN + HIDDEN * OUTPUT
                      + OUTPUT * H2 + H2) + 12 * RHS_ROWS)
TRANSCENDENTALS_PER_ROW = 1


# --------------------------- parameter packing ------------------------------
def pack_params(params, *, weights_dtype=jnp.bfloat16):
    """Fold & pack all parameters into one weight slab + one vector slab.

    wslab [WSLAB_ROWS, WSLAB_COLS] (weights_dtype): all matmul weights.
    vslab [VSLAB_ROWS, VSLAB_COLS] (f32): per-row constants (biases etc.).
    """
    p = {k: jnp.asarray(v, jnp.float32) for k, v in params.items()}
    w0 = p["w0"]                                   # [COMB, HIDDEN]
    W0A = w0[0 * H4:1 * H4].T                      # [HIDDEN, H4]
    W0B = w0[1 * H4:2 * H4].T
    W0C = w0[2 * H4:3 * H4].T
    W0D = w0[3 * H4:4 * H4].T

    # Fused front-end matrix M [HIDDEN, RHS_ROWS].
    m_front = jnp.zeros((HIDDEN, RHS_ROWS), jnp.float32)
    m_front = m_front.at[:, C_TX:C_TX + NUM_TX_TYPES].set(W0A @ p["tx_table"].T)
    m_front = m_front.at[:, C_DIR:C_DIR + NUM_DIRECTIONS].set(W0B @ p["dir_table"].T)
    m_front = m_front.at[:, C_AH:C_AH + H4].set(W0C @ p["aw2"].T)
    m_front = m_front.at[:, C_TH:C_TH + H4].set(W0D @ p["tw2"].T)
    m_front = m_front.at[:, C_FEE].set(w0[4 * H4])
    m_front = m_front.at[:, C_BH].set(w0[4 * H4 + 1])

    # BN (eval) folded into the next layer's weights / biases.
    w1t = p["w1"].T * p["s0"][None, :]             # [HIDDEN, HIDDEN]
    w2t = p["w2"].T * p["s1"][None, :]             # [OUTPUT, HIDDEN]
    wa1t = p["wa1"].T                              # [H2, OUTPUT]

    wslab = jnp.zeros((WSLAB_ROWS, WSLAB_COLS), jnp.float32)
    wslab = wslab.at[WR_M:WR_M + HIDDEN, 0:RHS_ROWS].set(m_front)
    wslab = wslab.at[WR_W1:WR_W1 + HIDDEN, 0:HIDDEN].set(w1t)
    wslab = wslab.at[WR_W2:WR_W2 + OUTPUT, 0:HIDDEN].set(w2t)
    wslab = wslab.at[WR_WA1:WR_WA1 + H2, 0:OUTPUT].set(wa1t)
    wslab = wslab.astype(weights_dtype)

    # Folded biases.
    b0f = p["b0"] + W0C @ p["ab2"] + W0D @ p["tb2"]        # [HIDDEN]
    b1f = p["b1"] + p["w1"].T @ p["sh0"]                   # [HIDDEN]
    b2f = p["b2"] + p["w2"].T @ p["sh1"]                   # [OUTPUT]

    vslab = jnp.zeros((VSLAB_ROWS, VSLAB_COLS), jnp.float32)
    vslab = vslab.at[C_AH:C_AH + H4, 0].set(p["aw1"][0])   # col 0: amount mult
    vslab = vslab.at[C_TH:C_TH + H4, 1].set(p["tw1"][0])   # col 1: time mult
    vslab = vslab.at[C_AH:C_AH + H4, 2].set(p["ab1"])      # col 2: sub-encoder bias
    vslab = vslab.at[C_TH:C_TH + H4, 2].set(p["tb1"])
    vslab = vslab.at[:HIDDEN, 3].set(b0f)                  # col 3: b0'
    vslab = vslab.at[:HIDDEN, 4].set(b1f)                  # col 4: b1'
    vslab = vslab.at[:OUTPUT, 5].set(b2f)                  # col 5: b2'
    vslab = vslab.at[:H2, 6].set(p["ba1"])                 # col 6: ba1
    vslab = vslab.at[:H2, 7].set(p["wa2"][:, 0])           # col 7: wa2
    vslab = vslab.at[0, 8].set(p["ba2"][0])                # col 8: ba2
    return wslab, vslab


# ------------------------------- kernel ------------------------------------
def edge_encoder_kernel(xT_ref, wslab_ref, vslab_ref, outT_ref):
    f32 = jnp.float32
    wdt = wslab_ref.dtype                            # matmul operand dtype

    x = xT_ref[...]                                  # [8, TN]; rows 6,7 pad
    tn = x.shape[1]

    amount = x[0:1, :]
    timestamp = x[1:2, :]
    direction = x[2:3, :].astype(jnp.int32)          # .long() truncation
    tx_type = x[3:4, :].astype(jnp.int32)
    fee = x[4:5, :]
    block_h = x[5:6, :]

    vec = vslab_ref[...]                             # [32, 16] f32
    ca, ct, cb = vec[:, 0:1], vec[:, 1:2], vec[:, 2:3]
    b0_c, b1_c = vec[:, 3:4], vec[:, 4:5]
    b2_c = vec[0:OUTPUT, 5:6]
    ba1_c = vec[0:H2, 6:7]
    wa2_c = vec[0:H2, 7:8]
    ba2 = vec[0:1, 8:9]

    # Fused front-end RHS [RHS_ROWS, TN], built without any concatenate:
    #   rows  0..9  one-hot(tx_type)      rows 10..11 one-hot(direction)
    #   rows 12..19 relu(aw1*amount+ab1)  rows 20..27 relu(tw1*time+tb1)
    #   row  28     fee                   row  29     block_height
    #   rows 30..31 zero padding
    ridx = lax.broadcasted_iota(jnp.int32, (RHS_ROWS, tn), 0)
    onehot = ((ridx == tx_type) & (ridx < NUM_TX_TYPES)) | (
        (ridx == direction + NUM_TX_TYPES)
        & (ridx < NUM_TX_TYPES + NUM_DIRECTIONS))
    sub = jnp.maximum(ca * amount + ct * timestamp + cb, 0.0)
    rhs = (onehot.astype(f32) + sub
           + jnp.where(ridx == C_FEE, fee, 0.0)
           + jnp.where(ridx == C_BH, block_h, 0.0)).astype(wdt)   # [32, TN]

    m_front = wslab_ref[WR_M:WR_M + HIDDEN, :]                    # [32, 32]
    w1t = wslab_ref[WR_W1:WR_W1 + HIDDEN, 0:HIDDEN]               # [32, 32]
    w2t = wslab_ref[WR_W2:WR_W2 + OUTPUT, 0:HIDDEN]               # [16, 32]
    wa1t = wslab_ref[WR_WA1:WR_WA1 + H2, 0:OUTPUT]                # [16, 16]

    # Layer 0/1/2.  Dropout = identity (eval); BN folded into w1t/w2t + biases.
    h0 = jnp.maximum(jnp.dot(m_front, rhs, preferred_element_type=f32) + b0_c, 0.0)
    h1 = jnp.maximum(jnp.dot(w1t, h0.astype(wdt), preferred_element_type=f32) + b1_c, 0.0)
    out = jnp.maximum(jnp.dot(w2t, h1.astype(wdt), preferred_element_type=f32) + b2_c, 0.0)

    # Attention: Linear(OUTPUT,H2) -> ReLU -> Linear(H2,1) -> Sigmoid, gate.
    # The H2->1 projection is a VPU multiply + sublane reduction (no 1-row MXU).
    att_h = jnp.maximum(
        jnp.dot(wa1t, out.astype(wdt), preferred_element_type=f32) + ba1_c, 0.0)
    att = jax.nn.sigmoid(jnp.sum(att_h * wa2_c, axis=0, keepdims=True) + ba2)

    outT_ref[...] = (out * att).astype(outT_ref.dtype)


# ------------------------------- wrappers -----------------------------------
def edge_encoder_forward_T(xT, wslab, vslab, *, row_tile, out_dtype=jnp.bfloat16):
    """Transposed entry point.  xT: [8, n_pad] f32 (n_pad % row_tile == 0).

    Returns out^T [OUTPUT, n_pad].  Use this directly in production to avoid
    the wrapper-side transpose HBM passes.
    """
    n_pad = xT.shape[1]
    assert n_pad % row_tile == 0

    cost = pl.CostEstimate(
        flops=FLOPS_PER_ROW * n_pad,
        transcendentals=TRANSCENDENTALS_PER_ROW * n_pad,
        bytes_accessed=(XROWS * 4 + OUTPUT * jnp.dtype(out_dtype).itemsize) * n_pad
        + wslab.size * wslab.dtype.itemsize + vslab.size * 4)

    # NOTE: the two slabs are constant across the grid (index_map -> (0,0)), so
    # they are DMA'd once and stay resident; single-buffering them via
    # pipeline_mode would only shave a few KiB of VMEM, so it is omitted.
    return pl.pallas_call(
        edge_encoder_kernel,
        out_shape=jax.ShapeDtypeStruct((OUTPUT, n_pad), out_dtype),
        grid=(n_pad // row_tile,),
        in_specs=[
            pl.BlockSpec((XROWS, row_tile), lambda i: (0, i)),       # x^T tile
            pl.BlockSpec((WSLAB_ROWS, WSLAB_COLS), lambda i: (0, 0)),  # weights
            pl.BlockSpec((VSLAB_ROWS, VSLAB_COLS), lambda i: (0, 0)),  # vectors
        ],
        out_specs=pl.BlockSpec((OUTPUT, row_tile), lambda i: (0, i)),
        compiler_params=pltpu.CompilerParams(dimension_semantics=("parallel",)),
        cost_estimate=cost,
    )(xT, wslab, vslab)


def edge_encoder_forward(edge_features, params, *, row_tile=4096,
                         out_dtype=jnp.bfloat16, weights_dtype=jnp.bfloat16):
    """Convenience wrapper: [N, 6] f32 in, [N, OUTPUT] out."""
    n = edge_features.shape[0]
    wslab, vslab = pack_params(params, weights_dtype=weights_dtype)

    row_tile = max(128, (row_tile // 128) * 128)
    row_tile = min(row_tile, _round_up(n, 128))          # don't exceed problem
    if n > 128:
        # v7x has 2 TensorCores: keep >= 2 steps on the parallel grid axis.
        row_tile = min(row_tile, _round_up((n + 1) // 2, 128))
    row_tile = max(row_tile, 128)
    n_pad = _round_up(n, row_tile)

    # TODO(synk): this transpose+pad and the final outT.T are extra HBM passes;
    # in production produce x^T upstream and consume [OUTPUT, N] directly via
    # edge_encoder_forward_T.
    xT = jnp.zeros((XROWS, n_pad), jnp.float32).at[:EDGE_DIM, :n].set(
        edge_features[:, :EDGE_DIM].T.astype(jnp.float32))

    outT = edge_encoder_forward_T(xT, wslab, vslab,
                                  row_tile=row_tile, out_dtype=out_dtype)
    return outT[:, :n].T                                   # [n, OUTPUT]


# ----------------------- plain-JAX reference (check) ------------------------
def edge_encoder_reference(x, p):
    amount, timestamp = x[:, 0:1], x[:, 1:2]
    direction = x[:, 2].astype(jnp.int32)
    tx_type = x[:, 3].astype(jnp.int32)
    fee, block_height = x[:, 4:5], x[:, 5:6]

    tx_emb = p["tx_table"][tx_type]
    dir_emb = p["dir_table"][direction]
    amount_emb = jnp.maximum(amount @ p["aw1"] + p["ab1"], 0) @ p["aw2"] + p["ab2"]
    time_emb = jnp.maximum(timestamp @ p["tw1"] + p["tb1"], 0) @ p["tw2"] + p["tb2"]
    comb = jnp.concatenate(
        [tx_emb, dir_emb, amount_emb, time_emb, fee, block_height], axis=1)

    h = jnp.maximum(comb @ p["w0"] + p["b0"], 0) * p["s0"] + p["sh0"]
    h = jnp.maximum(h @ p["w1"] + p["b1"], 0) * p["s1"] + p["sh1"]
    out = jnp.maximum(h @ p["w2"] + p["b2"], 0)
    att = jax.nn.sigmoid(jnp.maximum(out @ p["wa1"] + p["ba1"], 0) @ p["wa2"] + p["ba2"])
    return out * att


# --------------------------- parameter creation -----------------------------
def make_params(key):
    ks = jax.random.split(key, 32)
    k = iter(ks)

    def w(shape, scale=0.1):
        return jax.random.normal(next(k), shape, jnp.float32) * scale

    def b(shape):
        return jax.random.normal(next(k), shape, jnp.float32) * 0.01

    # fold eval-mode BatchNorm1d into per-feature scale/shift
    def bn(dim):
        gamma = 0.5 + jax.random.uniform(next(k), (dim,), jnp.float32)
        beta = jax.random.normal(next(k), (dim,), jnp.float32) * 0.01
        r_mean = jax.random.normal(next(k), (dim,), jnp.float32) * 0.01
        r_var = 0.5 + jax.random.uniform(next(k), (dim,), jnp.float32)
        scale = gamma / jnp.sqrt(r_var + BN_EPS)
        shift = beta - r_mean * scale
        return scale, shift

    s0, sh0 = bn(HIDDEN)
    s1, sh1 = bn(HIDDEN)
    return {
        "tx_table": w((NUM_TX_TYPES, H4), 0.2),
        "dir_table": w((NUM_DIRECTIONS, H4), 0.2),
        "aw1": w((1, H4)), "ab1": b((H4,)), "aw2": w((H4, H4)), "ab2": b((H4,)),
        "tw1": w((1, H4)), "tb1": b((H4,)), "tw2": w((H4, H4)), "tb2": b((H4,)),
        "w0": w((COMB, HIDDEN)), "b0": b((HIDDEN,)), "s0": s0, "sh0": sh0,
        "w1": w((HIDDEN, HIDDEN)), "b1": b((HIDDEN,)), "s1": s1, "sh1": sh1,
        "w2": w((HIDDEN, OUTPUT)), "b2": b((OUTPUT,)),
        "wa1": w((OUTPUT, H2)), "ba1": b((H2,)),
        "wa2": w((H2, 1)), "ba2": b((1,)),
    }


# ---------------------------------- main -------------------------------------
if __name__ == "__main__":
    key = jax.random.PRNGKey(0)
    k_param, k_a, k_t, k_d, k_x, k_f, k_b = jax.random.split(key, 7)

    params = make_params(k_param)

    N = 1000  # NOT a multiple of the row tile (exercises tail padding + 2-step grid)
    amount = jax.random.uniform(k_a, (N, 1), jnp.float32) * 10.0
    timestamp = jax.random.uniform(k_t, (N, 1), jnp.float32) * 10.0
    direction = jax.random.randint(k_d, (N, 1), 0, NUM_DIRECTIONS).astype(jnp.float32)
    tx_type = jax.random.randint(k_x, (N, 1), 0, NUM_TX_TYPES).astype(jnp.float32)
    fee = jax.random.uniform(k_f, (N, 1), jnp.float32)
    block_height = jax.random.uniform(k_b, (N, 1), jnp.float32) * 10.0
    edge_features = jnp.concatenate(
        [amount, timestamp, direction, tx_type, fee, block_height], axis=1)  # [N, 6]

    ref = edge_encoder_reference(edge_features, params)

    # Exact path (f32 weights, f32 output) -- tight tolerance.
    out_f32 = edge_encoder_forward(edge_features, params,
                                   out_dtype=jnp.float32,
                                   weights_dtype=jnp.float32)
    out_f32 = jax.block_until_ready(out_f32)
    assert out_f32.shape == (N, OUTPUT)
    assert jnp.allclose(out_f32, ref, rtol=2e-3, atol=2e-3), \
        "f32-path mismatch vs reference"

    # Fast path (default: bf16 weights + bf16 output) -- global relative check.
    out_bf16 = edge_encoder_forward(edge_features, params)
    out_bf16 = jax.block_until_ready(out_bf16)
    assert out_bf16.shape == (N, OUTPUT)
    err = float(jnp.max(jnp.abs(out_bf16.astype(jnp.float32) - ref)))
    scale = float(jnp.max(jnp.abs(ref)))
    assert err <= 5e-2 * scale + 1e-2, \
        f"bf16-path mismatch vs reference (err={err:.4f}, scale={scale:.4f})"

    print("KERNEL_OK")
</pallas_src>

<mosaic_0001>
module attributes {stable_mosaic.version = 11 : i64} {
  func.func @edge_encoder_kernel(%arg0: i32, %arg1: memref<8x512xf32, #tpu.memory_space<vmem>>, %arg2: memref<96x32xf32, #tpu.memory_space<vmem>>, %arg3: memref<32x16xf32, #tpu.memory_space<vmem>>, %arg4: memref<16x512xf32, #tpu.memory_space<vmem>>) attributes {dimension_semantics = [#tpu.dimension_semantics<parallel>], iteration_bounds = array<i64: 2>, scalar_prefetch = 0 : i64, scratch_operands = 0 : i64, tpu.core_type = #tpu.core_type<tc>, window_params = [{transform_indices = @transform_0, window_bounds = array<i64: 8, 512>}, {pipeline_mode = #tpu.pipeline_mode<synchronous>, transform_indices = @transform_1, window_bounds = array<i64: 96, 32>}, {pipeline_mode = #tpu.pipeline_mode<synchronous>, transform_indices = @transform_2, window_bounds = array<i64: 32, 16>}, {transform_indices = @transform_3, window_bounds = array<i64: 16, 512>}]} {
    %c0 = arith.constant 0 : index
    %c0_0 = arith.constant 0 : index
    %0 = vector.load %arg1[%c0, %c0_0] : memref<8x512xf32, #tpu.memory_space<vmem>>, vector<8x512xf32>
    %1 = vector.extract_strided_slice %0 {offsets = [0, 0], sizes = [1, 512], strides = [1, 1]} : vector<8x512xf32> to vector<1x512xf32>
    %2 = vector.extract_strided_slice %0 {offsets = [1, 0], sizes = [1, 512], strides = [1, 1]} : vector<8x512xf32> to vector<1x512xf32>
    %3 = vector.extract_strided_slice %0 {offsets = [2, 0], sizes = [1, 512], strides = [1, 1]} : vector<8x512xf32> to vector<1x512xf32>
    %4 = arith.fptosi %3 : vector<1x512xf32> to vector<1x512xi32>
    %5 = vector.extract_strided_slice %0 {offsets = [3, 0], sizes = [1, 512], strides = [1, 1]} : vector<8x512xf32> to vector<1x512xf32>
    %6 = arith.fptosi %5 : vector<1x512xf32> to vector<1x512xi32>
    %7 = vector.extract_strided_slice %0 {offsets = [4, 0], sizes = [1, 512], strides = [1, 1]} : vector<8x512xf32> to vector<1x512xf32>
    %8 = vector.extract_strided_slice %0 {offsets = [5, 0], sizes = [1, 512], strides = [1, 1]} : vector<8x512xf32> to vector<1x512xf32>
    %c0_1 = arith.constant 0 : index
    %c0_2 = arith.constant 0 : index
    %9 = vector.load %arg3[%c0_1, %c0_2] : memref<32x16xf32, #tpu.memory_space<vmem>>, vector<32x16xf32>
    %10 = vector.extract_strided_slice %9 {offsets = [0, 0], sizes = [32, 1], strides = [1, 1]} : vector<32x16xf32> to vector<32x1xf32>
    %11 = vector.extract_strided_slice %9 {offsets = [0, 1], sizes = [32, 1], strides = [1, 1]} : vector<32x16xf32> to vector<32x1xf32>
    %12 = vector.extract_strided_slice %9 {offsets = [0, 2], sizes = [32, 1], strides = [1, 1]} : vector<32x16xf32> to vector<32x1xf32>
    %13 = vector.extract_strided_slice %9 {offsets = [0, 3], sizes = [32, 1], strides = [1, 1]} : vector<32x16xf32> to vector<32x1xf32>
    %14 = vector.extract_strided_slice %9 {offsets = [0, 4], sizes = [32, 1], strides = [1, 1]} : vector<32x16xf32> to vector<32x1xf32>
    %15 = vector.extract_strided_slice %9 {offsets = [0, 5], sizes = [16, 1], strides = [1, 1]} : vector<32x16xf32> to vector<16x1xf32>
    %16 = vector.extract_strided_slice %9 {offsets = [0, 6], sizes = [16, 1], strides = [1, 1]} : vector<32x16xf32> to vector<16x1xf32>
    %17 = vector.extract_strided_slice %9 {offsets = [0, 7], sizes = [16, 1], strides = [1, 1]} : vector<32x16xf32> to vector<16x1xf32>
    %18 = vector.extract_strided_slice %9 {offsets = [0, 8], sizes = [1, 1], strides = [1, 1]} : vector<32x16xf32> to vector<1x1xf32>
    %19 = tpu.iota {dimensions = array<i32: 0>} : vector<32x512xi32>
    %20 = vector.broadcast %6 : vector<1x512xi32> to vector<32x512xi32>
    %21 = arith.cmpi eq, %19, %20 : vector<32x512xi32>
    %c10_i32 = arith.constant 10 : i32
    %22 = vector.broadcast %c10_i32 : i32 to vector<32x512xi32>
    %23 = arith.cmpi slt, %19, %22 : vector<32x512xi32>
    %24 = arith.andi %21, %23 : vector<32x512xi1>
    %c10_i32_3 = arith.constant 10 : i32
    %25 = vector.broadcast %c10_i32_3 : i32 to vector<1x512xi32>
    %26 = arith.addi %4, %25 : vector<1x512xi32>
    %27 = vector.broadcast %26 : vector<1x512xi32> to vector<32x512xi32>
    %28 = arith.cmpi eq, %19, %27 : vector<32x512xi32>
    %c12_i32 = arith.constant 12 : i32
    %29 = vector.broadcast %c12_i32 : i32 to vector<32x512xi32>
    %30 = arith.cmpi slt, %19, %29 : vector<32x512xi32>
    %31 = arith.andi %28, %30 : vector<32x512xi1>
    %32 = arith.ori %24, %31 : vector<32x512xi1>
    %33 = vector.broadcast %10 : vector<32x1xf32> to vector<32x512xf32>
    %34 = vector.broadcast %1 : vector<1x512xf32> to vector<32x512xf32>
    %35 = arith.mulf %33, %34 : vector<32x512xf32>
    %36 = vector.broadcast %11 : vector<32x1xf32> to vector<32x512xf32>
    %37 = vector.broadcast %2 : vector<1x512xf32> to vector<32x512xf32>
    %38 = arith.mulf %36, %37 : vector<32x512xf32>
    %39 = arith.addf %35, %38 : vector<32x512xf32>
    %40 = vector.broadcast %12 : vector<32x1xf32> to vector<32x512xf32>
    %41 = arith.addf %39, %40 : vector<32x512xf32>
    %cst = arith.constant 0.000000e+00 : f32
    %42 = vector.broadcast %cst : f32 to vector<32x512xf32>
    %43 = arith.maximumf %41, %42 : vector<32x512xf32>
    %44 = arith.extui %32 : vector<32x512xi1> to vector<32x512xi32>
    %45 = arith.sitofp %44 : vector<32x512xi32> to vector<32x512xf32>
    %46 = arith.addf %45, %43 : vector<32x512xf32>
    %c28_i32 = arith.constant 28 : i32
    %47 = vector.broadcast %c28_i32 : i32 to vector<32x512xi32>
    %48 = arith.cmpi eq, %19, %47 : vector<32x512xi32>
    %cst_4 = arith.constant 0.000000e+00 : f32
    %49 = vector.shape_cast %7 : vector<1x512xf32> to vector<1x512xf32>
    %50 = vector.broadcast %49 : vector<1x512xf32> to vector<32x512xf32>
    %51 = vector.broadcast %cst_4 : f32 to vector<32x512xf32>
    %52 = arith.select %48, %50, %51 : vector<32x512xi1>, vector<32x512xf32>
    %53 = arith.addf %46, %52 : vector<32x512xf32>
    %c29_i32 = arith.constant 29 : i32
    %54 = vector.broadcast %c29_i32 : i32 to vector<32x512xi32>
    %55 = arith.cmpi eq, %19, %54 : vector<32x512xi32>
    %cst_5 = arith.constant 0.000000e+00 : f32
    %56 = vector.shape_cast %8 : vector<1x512xf32> to vector<1x512xf32>
    %57 = vector.broadcast %56 : vector<1x512xf32> to vector<32x512xf32>
    %58 = vector.broadcast %cst_5 : f32 to vector<32x512xf32>
    %59 = arith.select %55, %57, %58 : vector<32x512xi1>, vector<32x512xf32>
    %60 = arith.addf %53, %59 : vector<32x512xf32>
    %c0_6 = arith.constant 0 : index
    %c0_7 = arith.constant 0 : index
    %61 = vector.load %arg2[%c0_6, %c0_7] : memref<96x32xf32, #tpu.memory_space<vmem>>, vector<32x32xf32>
    %c32 = arith.constant 32 : index
    %c0_8 = arith.constant 0 : index
    %62 = vector.load %arg2[%c32, %c0_8] : memref<96x32xf32, #tpu.memory_space<vmem>>, vector<32x32xf32>
    %c64 = arith.constant 64 : index
    %c0_9 = arith.constant 0 : index
    %63 = vector.load %arg2[%c64, %c0_9] : memref<96x32xf32, #tpu.memory_space<vmem>>, vector<16x32xf32>
    %c80 = arith.constant 80 : index
    %c0_10 = arith.constant 0 : index
    %64 = vector.load %arg2[%c80, %c0_10] : memref<96x32xf32, #tpu.memory_space<vmem>>, vector<16x16xf32>
    %cst_11 = arith.constant dense<0.000000e+00> : vector<32x512xf32>
    %65 = tpu.matmul %61, %60, %cst_11 {dimension_numbers = #tpu.dot_dimension_numbers<[1], [0], [0], [1], [0, 0, 1, 1], [], []>} : vector<32x32xf32>, vector<32x512xf32>, vector<32x512xf32> -> vector<32x512xf32>
    %66 = vector.broadcast %13 : vector<32x1xf32> to vector<32x512xf32>
    %67 = arith.addf %65, %66 : vector<32x512xf32>
    %cst_12 = arith.constant 0.000000e+00 : f32
    %68 = vector.broadcast %cst_12 : f32 to vector<32x512xf32>
    %69 = arith.maximumf %67, %68 : vector<32x512xf32>
    %cst_13 = arith.constant dense<0.000000e+00> : vector<32x512xf32>
    %70 = tpu.matmul %62, %69, %cst_13 {dimension_numbers = #tpu.dot_dimension_numbers<[1], [0], [0], [1], [0, 0, 1, 1], [], []>} : vector<32x32xf32>, vector<32x512xf32>, vector<32x512xf32> -> vector<32x512xf32>
    %71 = vector.broadcast %14 : vector<32x1xf32> to vector<32x512xf32>
    %72 = arith.addf %70, %71 : vector<32x512xf32>
    %cst_14 = arith.constant 0.000000e+00 : f32
    %73 = vector.broadcast %cst_14 : f32 to vector<32x512xf32>
    %74 = arith.maximumf %72, %73 : vector<32x512xf32>
    %cst_15 = arith.constant dense<0.000000e+00> : vector<16x512xf32>
    %75 = tpu.matmul %63, %74, %cst_15 {dimension_numbers = #tpu.dot_dimension_numbers<[1], [0], [0], [1], [0, 0, 1, 1], [], []>} : vector<16x32xf32>, vector<32x512xf32>, vector<16x512xf32> -> vector<16x512xf32>
    %76 = vector.broadcast %15 : vector<16x1xf32> to vector<16x512xf32>
    %77 = arith.addf %75, %76 : vector<16x512xf32>
    %cst_16 = arith.constant 0.000000e+00 : f32
    %78 = vector.broadcast %cst_16 : f32 to vector<16x512xf32>
    %79 = arith.maximumf %77, %78 : vector<16x512xf32>
    %cst_17 = arith.constant dense<0.000000e+00> : vector<16x512xf32>
    %80 = tpu.matmul %64, %79, %cst_17 {dimension_numbers = #tpu.dot_dimension_numbers<[1], [0], [0], [1], [0, 0, 1, 1], [], []>} : vector<16x16xf32>, vector<16x512xf32>, vector<16x512xf32> -> vector<16x512xf32>
    %81 = vector.broadcast %16 : vector<16x1xf32> to vector<16x512xf32>
    %82 = arith.addf %80, %81 : vector<16x512xf32>
    %cst_18 = arith.constant 0.000000e+00 : f32
    %83 = vector.broadcast %cst_18 : f32 to vector<16x512xf32>
    %84 = arith.maximumf %82, %83 : vector<16x512xf32>
    %85 = vector.broadcast %17 : vector<16x1xf32> to vector<16x512xf32>
    %86 = arith.mulf %84, %85 : vector<16x512xf32>
    %cst_19 = arith.constant dense<0.000000e+00> : vector<512xf32>
    %87 = vector.multi_reduction <add>, %86, %cst_19 [0] : vector<16x512xf32> to vector<512xf32>
    %88 = vector.shape_cast %87 : vector<512xf32> to vector<1x512xf32>
    %89 = vector.broadcast %18 : vector<1x1xf32> to vector<1x512xf32>
    %90 = arith.addf %88, %89 : vector<1x512xf32>
    %91 = arith.negf %90 : vector<1x512xf32>
    %92 = math.exp %91 : vector<1x512xf32>
    %cst_20 = arith.constant 1.000000e+00 : f32
    %93 = vector.broadcast %cst_20 : f32 to vector<1x512xf32>
    %94 = arith.addf %93, %92 : vector<1x512xf32>
    %95 = arith.divf %93, %94 : vector<1x512xf32>
    %96 = vector.broadcast %95 : vector<1x512xf32> to vector<16x512xf32>
    %97 = arith.mulf %79, %96 : vector<16x512xf32>
    %c0_21 = arith.constant 0 : index
    %c0_22 = arith.constant 0 : index
    %98 = vector.load %arg4[%c0_21, %c0_22] : memref<16x512xf32, #tpu.memory_space<vmem>>, vector<16x512xf32>
    tpu.vector_store %arg4[%c0_21, %c0_22], %97 {strides = array<i32>} : memref<16x512xf32, #tpu.memory_space<vmem>>, vector<16x512xf32>,
    return
  }
  func.func @transform_0(%arg0: i32) -> (i32, i32) {
    %c0_i32 = arith.constant 0 : i32
    %c0_i32_0 = arith.constant 0 : i32
    return %c0_i32, %arg0 : i32, i32
  }
  func.func @transform_1(%arg0: i32) -> (i32, i32) {
    %c0_i32 = arith.constant 0 : i32
    %c0_i32_0 = arith.constant 0 : i32
    %c0_i32_1 = arith.constant 0 : i32
    return %c0_i32, %c0_i32_0 : i32, i32
  }
  func.func @transform_2(%arg0: i32) -> (i32, i32) {
    %c0_i32 = arith.constant 0 : i32
    %c0_i32_0 = arith.constant 0 : i32
    %c0_i32_1 = arith.constant 0 : i32
    return %c0_i32, %c0_i32_0 : i32, i32
  }
  func.func @transform_3(%arg0: i32) -> (i32, i32) {
    %c0_i32 = arith.constant 0 : i32
    %c0_i32_0 = arith.constant 0 : i32
    return %c0_i32, %arg0 : i32, i32
  }
}

</mosaic_0001>

<llo_original>
// kernel: tpu_custom_call.1
$region0: #{tpu_custom_call.1}
  #allocation0 [shape = 'u32[]', space=smem, size = 0x4, offset = 0x4, fixed_abs, tag = 'smem constant byte address 0x4 - core index']
  #allocation1 [shape = 'u32[144,128]{1,0:T(1,128)}', space=vmem, size = 0x12000, scoped, tag = 'internal scratch']
  %s0 = inlined_call_operand.vmem [shape: f32[8,1024], index: 0, kind: input, shape index: {}]
  %s1 = inlined_call_operand.vmem [shape: f32[96,32], index: 1, kind: input, shape index: {}]
  %s2 = inlined_call_operand.vmem [shape: f32[32,16], index: 2, kind: input, shape index: {}]
  %s3 = inlined_call_operand.hbm [shape: f32[16,1024], index: 3, kind: output, shape index: {}]
  %s4 = sld [smem:[#allocation0]]
  $region45: #{tpu_custom_call.1} parent=0
    _
  %s6 = ssub.s32 1, %s4
  %s7 = scalar_select 0, %s6, %s4
  $region1: #{tpu_custom_call.1} parent=0
    #allocation2 [shape = 'u8[65536]{0}', space=vmem, size = 0x10000, scoped, tag = 'output window, operand 0']
    #allocation3 [shape = 's32[2]{0}', space=sflag, size = 0x8, scoped, tag = 'scoped memory for tpu_custom_call.1']
    %8 = vsyncpa [#allocation3], 0
    %s9 = scalar_lea.sflag [#allocation3], 1
    %10 = vsyncpa %s9, 0
    loop: start=0, step=1, limit=4
    $region2: #{tpu_custom_call.1} parent=1 // loop_pre_header
      _
    $region3: #{tpu_custom_call.1} parent=1 // loop_header
      %s12 = sphi 0, %s16
      %p13 = scmp.ge.s32.totalorder %s12, 4
      %s22 = sphi 0, %s24
      %s25 = sphi 0, %s22
      %s26 = sphi 0, %s25
      %s42 = sphi 0, %s26
      %s46 = sphi 0, %s46
      %s48 = sphi 0, %s46
      %s49 = sphi 0, %s48
      %s63 = sphi 0, %s49
      %s67 = sphi 0, %s67
      %s69 = sphi 0, %s67
      %s70 = sphi 0, %s69
      %s84 = sphi 0, %s70
      %s90 = sphi 0, %s92
      %s93 = sphi 0, %s90
      %s94 = sphi 0, %s93
      %s110 = sphi 0, %s94
    $region4: #{tpu_custom_call.1} parent=1 // loop_header_branch
      %15 = sbr.rel (%p13) target = $region8
    $region5: #{tpu_custom_call.1} parent=1 // loop_body
      %s17 = ssub.s32 %s12, 1
      %s18 = ssub.s32 %s12, 2
      %s19 = sadd.s32 %s12, 1
      %s20 = ssub.s32 %s12, %s19
      %p21 = scmp.eq.s32.totalorder %s20, 0
      %s23 = sadd.s32 %s22, 1
      %s24 = scalar_select %p21, %s22, %s23
      %p27 = pneg %p21
      %p28 = scmp.eq.s32.totalorder %s12, 1
      %p29 = por %p27, %p28
      %p30 = scmp.ne.s32.totalorder %s22, %s25
      %p31 = scmp.eq.s32.totalorder %s12, 0
      %p32 = por %p30, %p31
      %p33 = scmp.ne.s32.totalorder %s22, %s25
      %p34 = scmp.eq.s32.totalorder %s17, 1
      %p35 = por %p33, %p34
      %p36 = scmp.ne.s32.totalorder %s25, %s26
      %p37 = scmp.eq.s32.totalorder %s17, 0
      %p38 = por %p36, %p37
      %p39 = scmp.ne.s32.totalorder %s25, %s26
      %p40 = scmp.eq.s32.totalorder %s18, 1
      %p41 = por %p39, %p40
      %p43 = scmp.ne.s32.totalorder %s26, %s42
      %p44 = scmp.eq.s32.totalorder %s18, 0
      %p45 = por %p43, %p44
      %s47 = sadd.s32 %s46, 1
      %p50 = scmp.eq.s32.totalorder %s12, 1
      %p51 = scmp.ne.s32.totalorder %s46, %s48
      %p52 = scmp.eq.s32.totalorder %s12, 0
      %p53 = por %p51, %p52
      %p54 = scmp.ne.s32.totalorder %s46, %s48
      %p55 = scmp.eq.s32.totalorder %s17, 1
      %p56 = por %p54, %p55
      %p57 = scmp.ne.s32.totalorder %s48, %s49
      %p58 = scmp.eq.s32.totalorder %s17, 0
      %p59 = por %p57, %p58
      %p60 = scmp.ne.s32.totalorder %s48, %s49
      %p61 = scmp.eq.s32.totalorder %s18, 1
      %p62 = por %p60, %p61
      %p64 = scmp.ne.s32.totalorder %s49, %s63
      %p65 = scmp.eq.s32.totalorder %s18, 0
      %p66 = por %p64, %p65
      %s68 = sadd.s32 %s67, 1
      %p71 = scmp.eq.s32.totalorder %s12, 1
      %p72 = scmp.ne.s32.totalorder %s67, %s69
      %p73 = scmp.eq.s32.totalorder %s12, 0
      %p74 = por %p72, %p73
      %p75 = scmp.ne.s32.totalorder %s67, %s69
      %p76 = scmp.eq.s32.totalorder %s17, 1
      %p77 = por %p75, %p76
      %p78 = scmp.ne.s32.totalorder %s69, %s70
      %p79 = scmp.eq.s32.totalorder %s17, 0
      %p80 = por %p78, %p79
      %p81 = scmp.ne.s32.totalorder %s69, %s70
      %p82 = scmp.eq.s32.totalorder %s18, 1
      %p83 = por %p81, %p82
      %p85 = scmp.ne.s32.totalorder %s70, %s84
      %p86 = scmp.eq.s32.totalorder %s18, 0
      %p87 = por %p85, %p86
      %s88 = ssub.s32 %s12, %s19
      %p89 = scmp.eq.s32.totalorder %s88, 0
      %s91 = sadd.s32 %s90, 1
      %s92 = scalar_select %p89, %s90, %s91
      %p95 = pneg %p89
      %p96 = scmp.eq.s32.totalorder %s12, 1
      %p97 = por %p95, %p96
      %p98 = scmp.ne.s32.totalorder %s90, %s93
      %p99 = scmp.eq.s32.totalorder %s12, 0
      %p100 = por %p98, %p99
      %p101 = scmp.ne.s32.totalorder %s90, %s93
      %p102 = scmp.eq.s32.totalorder %s17, 1
      %p103 = por %p101, %p102
      %p104 = scmp.ne.s32.totalorder %s93, %s94
      %p105 = scmp.eq.s32.totalorder %s17, 0
      %p106 = por %p104, %p105
      %p107 = scmp.ne.s32.totalorder %s93, %s94
      %p108 = scmp.eq.s32.totalorder %s18, 1
      %p109 = por %p107, %p108
      %p111 = scmp.ne.s32.totalorder %s94, %s110
      %p112 = scmp.eq.s32.totalorder %s18, 0
      %p113 = por %p111, %p112
      %p114 = scmp.le.s32.totalorder 1, %s12
      %p115 = scmp.lt.s32.totalorder %s12, 3
      %p116 = pnand %p114, %p115
      %p117 = pneg %p116
      // Predicated region
      $region9: #{tpu_custom_call.1} parent=5 // pred_check
        _
      $region10: #{tpu_custom_call.1} parent=5 // pred_check_branch
        %119 = sbr.rel (%p116) target = $region12
      $region11: #{tpu_custom_call.1} parent=5 // pred_region
        %s120 = ssub.s32 %s12, 1
        // Predicated region
        $region13: #{tpu_custom_call.1} parent=11 // pred_check
          %p121 = pneg %p59
        $region14: #{tpu_custom_call.1} parent=11 // pred_check_branch
          %123 = sbr.rel (%p121) target = $region16
        $region15: #{tpu_custom_call.1} parent=11 // pred_region
          _
        $region16: #{tpu_custom_call.1} parent=11 // pred_fallthru
          _
        // Predicated region
        $region17: #{tpu_custom_call.1} parent=11 // pred_check
          %p124 = pneg %p80
        $region18: #{tpu_custom_call.1} parent=11 // pred_check_branch
          %126 = sbr.rel (%p124) target = $region20
        $region19: #{tpu_custom_call.1} parent=11 // pred_region
          _
        $region20: #{tpu_custom_call.1} parent=11 // pred_fallthru
          _
      $region12: #{tpu_custom_call.1} parent=5 // pred_fallthru
        _
      %p127 = scmp.lt.s32.totalorder %s12, 2
      // Predicated region
      $region21: #{tpu_custom_call.1} parent=5 // pred_check
        %p128 = pneg %p127
      $region22: #{tpu_custom_call.1} parent=5 // pred_check_branch
        %130 = sbr.rel (%p128) target = $region24
      $region23: #{tpu_custom_call.1} parent=5 // pred_region
        // Predicated region
        $region25: #{tpu_custom_call.1} parent=23 // pred_check
          %p131 = pneg %p32
        $region26: #{tpu_custom_call.1} parent=23 // pred_check_branch
          %133 = sbr.rel (%p131) target = $region28
        $region27: #{tpu_custom_call.1} parent=23 // pred_region
          %s134 = smul.u32 4, %s12
          %p135 = scmp.lt.s32.totalorder %s134, 7
          %s136 = scalar_select %p135, %s134, 7
          %s137 = smul.addr %s136, 8
          %s138 = scalar_lea.vmem %s0, %s137
          %s139 = smul.u32 4, %s12
        $region28: #{tpu_custom_call.1} parent=23 // pred_fallthru
          _
      $region24: #{tpu_custom_call.1} parent=5 // pred_fallthru
        _
      %p140 = scmp.le.s32.totalorder 1, %s12
      %p141 = scmp.lt.s32.totalorder %s12, 3
      %p142 = pnand %p140, %p141
      %p143 = pneg %p142
      // Predicated region
      $region29: #{tpu_custom_call.1} parent=5 // pred_check
        _
      $region30: #{tpu_custom_call.1} parent=5 // pred_check_branch
        %145 = sbr.rel (%p142) target = $region32
      $region31: #{tpu_custom_call.1} parent=5 // pred_region
        %s146 = ssub.s32 %s12, 1
        %s147 = smul.u32 4, %s17
        %p148 = scmp.lt.s32.totalorder %s147, 7
        %s149 = scalar_select %p148, %s147, 7
        %s150 = smul.addr %s149, 8
        %s151 = scalar_lea.vmem %s0, %s150
        %p152 = pneg %p38
        %p153 = pneg %p35
        %p154 = pneg %p59
        %p155 = pneg %p56
        %p156 = pneg %p80
        %p157 = pneg %p77
        %p158 = pneg %p106
        %p159 = pneg %p103
        %s160 = sand.u32 %s93, 1
        %s161 = scalar_lea.sflag [#allocation3], %s160
        %s162 = sand.u32 %s93, 1
        %s163 = smul.addr %s162, 64
        %s164 = scalar_lea.vmem [#allocation2], %s163
        %s165 = smul.u32 4, %s17
        %p166 = scmp.lt.s32.totalorder %s165, 7
        %s167 = scalar_select %p166, %s165, 7
        %s168 = smul.addr %s167, 8
        %s169 = scalar_lea.vmem %s0, %s168
        %s170 = smul.u32 4, %s17
        %s171 = smul.u32 4, %s17
        %v172 = vld [vmem:[%s169] sm:$0xff]
        %v173 = vld [vmem:[%s169 + $0x8] sm:$0xff]
        %v174 = vld [vmem:[%s169 + $0x10] sm:$0xff]
        %v175 = vld [vmem:[%s169 + $0x18] sm:$0xff]
        %v176 = vcvt.f32.s32.to.zero.pseudo %v172
        %v177 = vcvt.f32.s32.to.zero.pseudo %v173
        %v178 = vcvt.f32.s32.to.zero.pseudo %v174
        %v179 = vcvt.f32.s32.to.zero.pseudo %v175
        %v180 = vld [vmem:[%s2] sm:$0xff]
        %v181 = vld [vmem:[%s2 + $0x8] sm:$0xff]
        %v182 = vld [vmem:[%s2 + $0x10] sm:$0xff]
        %v183 = vld [vmem:[%s2 + $0x18] sm:$0xff]
        %v184 = vlaneseq
        %v185 = vshrl.u32 %v184, 7
        %v186 = vadd.s32 %v185, 8
        %v187 = vadd.s32 %v185, 16
        %v188 = vadd.s32 %v185, 24
        %v189 = vlaneseq
        %v190 = vshrl.u32 %v189, 7
        %v191 = vsub.s32 3, %v190
        %v192 = vrot.slane %v176, %v191
        %v193 = vlaneseq
        %v194 = vshrl.u32 %v193, 7
        %v195 = vsub.s32 3, %v194
        %v196 = vrot.slane %v177, %v195
        %v197 = vlaneseq
        %v198 = vshrl.u32 %v197, 7
        %v199 = vsub.s32 3, %v198
        %v200 = vrot.slane %v178, %v199
        %v201 = vlaneseq
        %v202 = vshrl.u32 %v201, 7
        %v203 = vsub.s32 3, %v202
        %v204 = vrot.slane %v179, %v203
        %vm205 = vcmp.eq.s32.totalorder %v185, %v192
        %vm206 = vcmp.eq.s32.totalorder %v185, %v196
        %vm207 = vcmp.eq.s32.totalorder %v185, %v200
        %vm208 = vcmp.eq.s32.totalorder %v185, %v204
        %vm209 = vcmp.eq.s32.totalorder %v186, %v192
        %vm210 = vcmp.eq.s32.totalorder %v186, %v196
        %vm211 = vcmp.eq.s32.totalorder %v186, %v200
        %vm212 = vcmp.eq.s32.totalorder %v186, %v204
        %vm213 = vcmp.eq.s32.totalorder %v187, %v192
        %vm214 = vcmp.eq.s32.totalorder %v187, %v196
        %vm215 = vcmp.eq.s32.totalorder %v187, %v200
        %vm216 = vcmp.eq.s32.totalorder %v187, %v204
        %vm217 = vcmp.eq.s32.totalorder %v188, %v192
        %vm218 = vcmp.eq.s32.totalorder %v188, %v196
        %vm219 = vcmp.eq.s32.totalorder %v188, %v200
        %vm220 = vcmp.eq.s32.totalorder %v188, %v204
        %vm221 = vcmp.lt.s32.totalorder %v185, 10
        %vm222 = vcmp.lt.s32.totalorder %v186, 10
        %vm223 = vcmp.lt.s32.totalorder %v187, 10
        %vm224 = vcmp.lt.s32.totalorder %v188, 10
        %vm225 = vmand %vm205, %vm221
        %vm226 = vmand %vm206, %vm221
        %vm227 = vmand %vm207, %vm221
        %vm228 = vmand %vm208, %vm221
        %vm229 = vmand %vm209, %vm222
        %vm230 = vmand %vm210, %vm222
        %vm231 = vmand %vm211, %vm222
        %vm232 = vmand %vm212, %vm222
        %vm233 = vmand %vm213, %vm223
        %vm234 = vmand %vm214, %vm223
        %vm235 = vmand %vm215, %vm223
        %vm236 = vmand %vm216, %vm223
        %vm237 = vmand %vm217, %vm224
        %vm238 = vmand %vm218, %vm224
        %vm239 = vmand %vm219, %vm224
        %vm240 = vmand %vm220, %vm224
        %v241 = vadd.s32 %v176, 10
        %v242 = vadd.s32 %v177, 10
        %v243 = vadd.s32 %v178, 10
        %v244 = vadd.s32 %v179, 10
        %v245 = vlaneseq
        %v246 = vshrl.u32 %v245, 7
        %v247 = vsub.s32 2, %v246
        %v248 = vrot.slane %v241, %v247
        %v249 = vlaneseq
        %v250 = vshrl.u32 %v249, 7
        %v251 = vsub.s32 2, %v250
        %v252 = vrot.slane %v242, %v251
        %v253 = vlaneseq
        %v254 = vshrl.u32 %v253, 7
        %v255 = vsub.s32 2, %v254
        %v256 = vrot.slane %v243, %v255
        %v257 = vlaneseq
        %v258 = vshrl.u32 %v257, 7
        %v259 = vsub.s32 2, %v258
        %v260 = vrot.slane %v244, %v259
        %vm261 = vcmp.eq.s32.totalorder %v185, %v248
        %vm262 = vcmp.eq.s32.totalorder %v185, %v252
        %vm263 = vcmp.eq.s32.totalorder %v185, %v256
        %vm264 = vcmp.eq.s32.totalorder %v185, %v260
        %vm265 = vcmp.eq.s32.totalorder %v186, %v248
        %vm266 = vcmp.eq.s32.totalorder %v186, %v252
        %vm267 = vcmp.eq.s32.totalorder %v186, %v256
        %vm268 = vcmp.eq.s32.totalorder %v186, %v260
        %vm269 = vcmp.eq.s32.totalorder %v187, %v248
        %vm270 = vcmp.eq.s32.totalorder %v187, %v252
        %vm271 = vcmp.eq.s32.totalorder %v187, %v256
        %vm272 = vcmp.eq.s32.totalorder %v187, %v260
        %vm273 = vcmp.eq.s32.totalorder %v188, %v248
        %vm274 = vcmp.eq.s32.totalorder %v188, %v252
        %vm275 = vcmp.eq.s32.totalorder %v188, %v256
        %vm276 = vcmp.eq.s32.totalorder %v188, %v260
        %vm277 = vcmp.lt.s32.totalorder %v185, 12
        %vm278 = vcmp.lt.s32.totalorder %v186, 12
        %vm279 = vcmp.lt.s32.totalorder %v187, 12
        %vm280 = vcmp.lt.s32.totalorder %v188, 12
        %vm281 = vmand %vm261, %vm277
        %vm282 = vmand %vm262, %vm277
        %vm283 = vmand %vm263, %vm277
        %vm284 = vmand %vm264, %vm277
        %vm285 = vmand %vm265, %vm278
        %vm286 = vmand %vm266, %vm278
        %vm287 = vmand %vm267, %vm278
        %vm288 = vmand %vm268, %vm278
        %vm289 = vmand %vm269, %vm279
        %vm290 = vmand %vm270, %vm279
        %vm291 = vmand %vm271, %vm279
        %vm292 = vmand %vm272, %vm279
        %vm293 = vmand %vm273, %vm280
        %vm294 = vmand %vm274, %vm280
        %vm295 = vmand %vm275, %vm280
        %vm296 = vmand %vm276, %vm280
        %vm297 = vmor %vm225, %vm281
        %vm298 = vmor %vm226, %vm282
        %vm299 = vmor %vm227, %vm283
        %vm300 = vmor %vm228, %vm284
        %vm301 = vmor %vm229, %vm285
        %vm302 = vmor %vm230, %vm286
        %vm303 = vmor %vm231, %vm287
        %vm304 = vmor %vm232, %vm288
        %vm305 = vmor %vm233, %vm289
        %vm306 = vmor %vm234, %vm290
        %vm307 = vmor %vm235, %vm291
        %vm308 = vmor %vm236, %vm292
        %vm309 = vmor %vm237, %vm293
        %vm310 = vmor %vm238, %vm294
        %vm311 = vmor %vm239, %vm295
        %vm312 = vmor %vm240, %vm296
        %314 = vset.pattern.permute.xlu0 0
        %315 = vperm.xlu0 %314, %v180
        %v316 = vpop.permute.xlu0 %315
        %319 = vset.pattern.permute.xlu0 0
        %320 = vperm.xlu0 %319, %v181
        %v321 = vpop.permute.xlu0 %320
        %324 = vset.pattern.permute.xlu0 0
        %325 = vperm.xlu0 %324, %v182
        %v326 = vpop.permute.xlu0 %325
        %329 = vset.pattern.permute.xlu0 0
        %330 = vperm.xlu0 %329, %v183
        %v331 = vpop.permute.xlu0 %330
        %v333 = vlaneseq
        %v334 = vshrl.u32 %v333, 7
        %v335 = vsub.s32 0, %v334
        %v336 = vrot.slane %v172, %v335
        %v337 = vlaneseq
        %v338 = vshrl.u32 %v337, 7
        %v339 = vsub.s32 0, %v338
        %v340 = vrot.slane %v173, %v339
        %v341 = vlaneseq
        %v342 = vshrl.u32 %v341, 7
        %v343 = vsub.s32 0, %v342
        %v344 = vrot.slane %v174, %v343
        %v345 = vlaneseq
        %v346 = vshrl.u32 %v345, 7
        %v347 = vsub.s32 0, %v346
        %v348 = vrot.slane %v175, %v347
        %v349 = vmul.f32 %v316, %v336
        %v350 = vmul.f32 %v316, %v340
        %v351 = vmul.f32 %v316, %v344
        %v352 = vmul.f32 %v316, %v348
        %v353 = vmul.f32 %v321, %v336
        %v354 = vmul.f32 %v321, %v340
        %v355 = vmul.f32 %v321, %v344
        %v356 = vmul.f32 %v321, %v348
        %v357 = vmul.f32 %v326, %v336
        %v358 = vmul.f32 %v326, %v340
        %v359 = vmul.f32 %v326, %v344
        %v360 = vmul.f32 %v326, %v348
        %v361 = vmul.f32 %v331, %v336
        %v362 = vmul.f32 %v331, %v340
        %v363 = vmul.f32 %v331, %v344
        %v364 = vmul.f32 %v331, %v348
        %365 = vset.pattern.permute.xlu0 1
        %366 = vperm.xlu0 %365, %v180
        %v367 = vpop.permute.xlu0 %366
        %369 = vset.pattern.permute.xlu0 1
        %370 = vperm.xlu0 %369, %v181
        %v371 = vpop.permute.xlu0 %370
        %373 = vset.pattern.permute.xlu0 1
        %374 = vperm.xlu0 %373, %v182
        %v375 = vpop.permute.xlu0 %374
        %377 = vset.pattern.permute.xlu0 1
        %378 = vperm.xlu0 %377, %v183
        %v379 = vpop.permute.xlu0 %378
        %v381 = vlaneseq
        %v382 = vshrl.u32 %v381, 7
        %v383 = vsub.s32 1, %v382
        %v384 = vrot.slane %v172, %v383
        %v385 = vlaneseq
        %v386 = vshrl.u32 %v385, 7
        %v387 = vsub.s32 1, %v386
        %v388 = vrot.slane %v173, %v387
        %v389 = vlaneseq
        %v390 = vshrl.u32 %v389, 7
        %v391 = vsub.s32 1, %v390
        %v392 = vrot.slane %v174, %v391
        %v393 = vlaneseq
        %v394 = vshrl.u32 %v393, 7
        %v395 = vsub.s32 1, %v394
        %v396 = vrot.slane %v175, %v395
        %v397 = vmul.f32 %v367, %v384
        %v398 = vmul.f32 %v367, %v388
        %v399 = vmul.f32 %v367, %v392
        %v400 = vmul.f32 %v367, %v396
        %v401 = vmul.f32 %v371, %v384
        %v402 = vmul.f32 %v371, %v388
        %v403 = vmul.f32 %v371, %v392
        %v404 = vmul.f32 %v371, %v396
        %v405 = vmul.f32 %v375, %v384
        %v406 = vmul.f32 %v375, %v388
        %v407 = vmul.f32 %v375, %v392
        %v408 = vmul.f32 %v375, %v396
        %v409 = vmul.f32 %v379, %v384
        %v410 = vmul.f32 %v379, %v388
        %v411 = vmul.f32 %v379, %v392
        %v412 = vmul.f32 %v379, %v396
        %v413 = vadd.f32 %v349, %v397
        %v414 = vadd.f32 %v350, %v398
        %v415 = vadd.f32 %v351, %v399
        %v416 = vadd.f32 %v352, %v400
        %v417 = vadd.f32 %v353, %v401
        %v418 = vadd.f32 %v354, %v402
        %v419 = vadd.f32 %v355, %v403
        %v420 = vadd.f32 %v356, %v404
        %v421 = vadd.f32 %v357, %v405
        %v422 = vadd.f32 %v358, %v406
        %v423 = vadd.f32 %v359, %v407
        %v424 = vadd.f32 %v360, %v408
        %v425 = vadd.f32 %v361, %v409
        %v426 = vadd.f32 %v362, %v410
        %v427 = vadd.f32 %v363, %v411
        %v428 = vadd.f32 %v364, %v412
        %429 = vset.pattern.permute.xlu0 2
        %430 = vperm.xlu0 %429, %v180
        %v431 = vpop.permute.xlu0 %430
        %433 = vset.pattern.permute.xlu0 2
        %434 = vperm.xlu0 %433, %v181
        %v435 = vpop.permute.xlu0 %434
        %437 = vset.pattern.permute.xlu0 2
        %438 = vperm.xlu0 %437, %v182
        %v439 = vpop.permute.xlu0 %438
        %441 = vset.pattern.permute.xlu0 2
        %442 = vperm.xlu0 %441, %v183
        %v443 = vpop.permute.xlu0 %442
        %v445 = vadd.f32 %v413, %v431
        %v446 = vadd.f32 %v414, %v431
        %v447 = vadd.f32 %v415, %v431
        %v448 = vadd.f32 %v416, %v431
        %v449 = vadd.f32 %v417, %v435
        %v450 = vadd.f32 %v418, %v435
        %v451 = vadd.f32 %v419, %v435
        %v452 = vadd.f32 %v420, %v435
        %v453 = vadd.f32 %v421, %v439
        %v454 = vadd.f32 %v422, %v439
        %v455 = vadd.f32 %v423, %v439
        %v456 = vadd.f32 %v424, %v439
        %v457 = vadd.f32 %v425, %v443
        %v458 = vadd.f32 %v426, %v443
        %v459 = vadd.f32 %v427, %v443
        %v460 = vadd.f32 %v428, %v443
        %v461 = vmax.f32 %v445, 0.0
        %v462 = vmax.f32 %v446, 0.0
        %v463 = vmax.f32 %v447, 0.0
        %v464 = vmax.f32 %v448, 0.0
        %v465 = vmax.f32 %v449, 0.0
        %v466 = vmax.f32 %v450, 0.0
        %v467 = vmax.f32 %v451, 0.0
        %v468 = vmax.f32 %v452, 0.0
        %v469 = vmax.f32 %v453, 0.0
        %v470 = vmax.f32 %v454, 0.0
        %v471 = vmax.f32 %v455, 0.0
        %v472 = vmax.f32 %v456, 0.0
        %v473 = vmax.f32 %v457, 0.0
        %v474 = vmax.f32 %v458, 0.0
        %v475 = vmax.f32 %v459, 0.0
        %v476 = vmax.f32 %v460, 0.0
        %v477 = vsel %vm297, 1, 0
        %v478 = vsel %vm298, 1, 0
        %v479 = vsel %vm299, 1, 0
        %v480 = vsel %vm300, 1, 0
        %v481 = vsel %vm301, 1, 0
        %v482 = vsel %vm302, 1, 0
        %v483 = vsel %vm303, 1, 0
        %v484 = vsel %vm304, 1, 0
        %v485 = vsel %vm305, 1, 0
        %v486 = vsel %vm306, 1, 0
        %v487 = vsel %vm307, 1, 0
        %v488 = vsel %vm308, 1, 0
        %v489 = vsel %vm309, 1, 0
        %v490 = vsel %vm310, 1, 0
        %v491 = vsel %vm311, 1, 0
        %v492 = vsel %vm312, 1, 0
        %v493 = vcvt.s32.f32 %v477
        %v494 = vcvt.s32.f32 %v478
        %v495 = vcvt.s32.f32 %v479
        %v496 = vcvt.s32.f32 %v480
        %v497 = vcvt.s32.f32 %v481
        %v498 = vcvt.s32.f32 %v482
        %v499 = vcvt.s32.f32 %v483
        %v500 = vcvt.s32.f32 %v484
        %v501 = vcvt.s32.f32 %v485
        %v502 = vcvt.s32.f32 %v486
        %v503 = vcvt.s32.f32 %v487
        %v504 = vcvt.s32.f32 %v488
        %v505 = vcvt.s32.f32 %v489
        %v506 = vcvt.s32.f32 %v490
        %v507 = vcvt.s32.f32 %v491
        %v508 = vcvt.s32.f32 %v492
        %v509 = vadd.f32 %v493, %v461
        %v510 = vadd.f32 %v494, %v462
        %v511 = vadd.f32 %v495, %v463
        %v512 = vadd.f32 %v496, %v464
        %v513 = vadd.f32 %v497, %v465
        %v514 = vadd.f32 %v498, %v466
        %v515 = vadd.f32 %v499, %v467
        %v516 = vadd.f32 %v500, %v468
        %v517 = vadd.f32 %v501, %v469
        %v518 = vadd.f32 %v502, %v470
        %v519 = vadd.f32 %v503, %v471
        %v520 = vadd.f32 %v504, %v472
        %v521 = vadd.f32 %v505, %v473
        %v522 = vadd.f32 %v506, %v474
        %v523 = vadd.f32 %v507, %v475
        %v524 = vadd.f32 %v508, %v476
        %vm525 = vcmp.eq.s32.totalorder %v185, 28
        %vm526 = vcmp.eq.s32.totalorder %v186, 28
        %vm527 = vcmp.eq.s32.totalorder %v187, 28
        %vm528 = vcmp.eq.s32.totalorder %v188, 28
        %v529 = vlaneseq
        %v530 = vshrl.u32 %v529, 7
        %v531 = vsub.s32 4, %v530
        %v532 = vrot.slane %v172, %v531
        %v533 = vlaneseq
        %v534 = vshrl.u32 %v533, 7
        %v535 = vsub.s32 4, %v534
        %v536 = vrot.slane %v173, %v535
        %v537 = vlaneseq
        %v538 = vshrl.u32 %v537, 7
        %v539 = vsub.s32 4, %v538
        %v540 = vrot.slane %v174, %v539
        %v541 = vlaneseq
        %v542 = vshrl.u32 %v541, 7
        %v543 = vsub.s32 4, %v542
        %v544 = vrot.slane %v175, %v543
        %v545 = vsel %vm525, %v532, 0.0
        %v546 = vsel %vm525, %v536, 0.0
        %v547 = vsel %vm525, %v540, 0.0
        %v548 = vsel %vm525, %v544, 0.0
        %v549 = vsel %vm526, %v532, 0.0
        %v550 = vsel %vm526, %v536, 0.0
        %v551 = vsel %vm526, %v540, 0.0
        %v552 = vsel %vm526, %v544, 0.0
        %v553 = vsel %vm527, %v532, 0.0
        %v554 = vsel %vm527, %v536, 0.0
        %v555 = vsel %vm527, %v540, 0.0
        %v556 = vsel %vm527, %v544, 0.0
        %v557 = vsel %vm528, %v532, 0.0
        %v558 = vsel %vm528, %v536, 0.0
        %v559 = vsel %vm528, %v540, 0.0
        %v560 = vsel %vm528, %v544, 0.0
        %v561 = vadd.f32 %v509, %v545
        %v562 = vadd.f32 %v510, %v546
        %v563 = vadd.f32 %v511, %v547
        %v564 = vadd.f32 %v512, %v548
        %v565 = vadd.f32 %v513, %v549
        %v566 = vadd.f32 %v514, %v550
        %v567 = vadd.f32 %v515, %v551
        %v568 = vadd.f32 %v516, %v552
        %v569 = vadd.f32 %v517, %v553
        %v570 = vadd.f32 %v518, %v554
        %v571 = vadd.f32 %v519, %v555
        %v572 = vadd.f32 %v520, %v556
        %v573 = vadd.f32 %v521, %v557
        %v574 = vadd.f32 %v522, %v558
        %v575 = vadd.f32 %v523, %v559
        %v576 = vadd.f32 %v524, %v560
        %vm577 = vcmp.eq.s32.totalorder %v185, 29
        %vm578 = vcmp.eq.s32.totalorder %v186, 29
        %vm579 = vcmp.eq.s32.totalorder %v187, 29
        %vm580 = vcmp.eq.s32.totalorder %v188, 29
        %v581 = vlaneseq
        %v582 = vshrl.u32 %v581, 7
        %v583 = vsub.s32 5, %v582
        %v584 = vrot.slane %v172, %v583
        %v585 = vlaneseq
        %v586 = vshrl.u32 %v585, 7
        %v587 = vsub.s32 5, %v586
        %v588 = vrot.slane %v173, %v587
        %v589 = vlaneseq
        %v590 = vshrl.u32 %v589, 7
        %v591 = vsub.s32 5, %v590
        %v592 = vrot.slane %v174, %v591
        %v593 = vlaneseq
        %v594 = vshrl.u32 %v593, 7
        %v595 = vsub.s32 5, %v594
        %v596 = vrot.slane %v175, %v595
        %v597 = vsel %vm577, %v584, 0.0
        %v598 = vsel %vm577, %v588, 0.0
        %v599 = vsel %vm577, %v592, 0.0
        %v600 = vsel %vm577, %v596, 0.0
        %v601 = vsel %vm578, %v584, 0.0
        %v602 = vsel %vm578, %v588, 0.0
        %v603 = vsel %vm578, %v592, 0.0
        %v604 = vsel %vm578, %v596, 0.0
        %v605 = vsel %vm579, %v584, 0.0
        %v606 = vsel %vm579, %v588, 0.0
        %v607 = vsel %vm579, %v592, 0.0
        %v608 = vsel %vm579, %v596, 0.0
        %v609 = vsel %vm580, %v584, 0.0
        %v610 = vsel %vm580, %v588, 0.0
        %v611 = vsel %vm580, %v592, 0.0
        %v612 = vsel %vm580, %v596, 0.0
        %v613 = vadd.f32 %v561, %v597
        %v614 = vadd.f32 %v562, %v598
        %v615 = vadd.f32 %v563, %v599
        %v616 = vadd.f32 %v564, %v600
        %v617 = vadd.f32 %v565, %v601
        %v618 = vadd.f32 %v566, %v602
        %v619 = vadd.f32 %v567, %v603
        %v620 = vadd.f32 %v568, %v604
        %v621 = vadd.f32 %v569, %v605
        %v622 = vadd.f32 %v570, %v606
        %v623 = vadd.f32 %v571, %v607
        %v624 = vadd.f32 %v572, %v608
        %v625 = vadd.f32 %v573, %v609
        %v626 = vadd.f32 %v574, %v610
        %v627 = vadd.f32 %v575, %v611
        %v628 = vadd.f32 %v576, %v612
        %v629 = vld [vmem:[%s1] sm:$0xff]
        %v630 = vld [vmem:[%s1 + $0x8] sm:$0xff]
        %v631 = vld [vmem:[%s1 + $0x10] sm:$0xff]
        %v632 = vld [vmem:[%s1 + $0x18] sm:$0xff]
        %v633 = vld [vmem:[%s1 + $0x20] sm:$0xff]
        %v634 = vld [vmem:[%s1 + $0x28] sm:$0xff]
        %v635 = vld [vmem:[%s1 + $0x30] sm:$0xff]
        %v636 = vld [vmem:[%s1 + $0x38] sm:$0xff]
        %v637 = vld [vmem:[%s1 + $0x40] sm:$0xff]
        %v638 = vld [vmem:[%s1 + $0x48] sm:$0xff]
        %v639 = vld [vmem:[%s1 + $0x50] sm:$0xff]
        %v640 = vld [vmem:[%s1 + $0x58] sm:$0xff]
        %641 = vset.pattern.permute.xlu0 3
        %642 = vperm.xlu0 %641, %v180
        %v643 = vpop.permute.xlu0 %642
        %645 = vset.pattern.permute.xlu0 3
        %646 = vperm.xlu0 %645, %v181
        %v647 = vpop.permute.xlu0 %646
        %649 = vset.pattern.permute.xlu0 3
        %650 = vperm.xlu0 %649, %v182
        %v651 = vpop.permute.xlu0 %650
        %653 = vset.pattern.permute.xlu0 3
        %654 = vperm.xlu0 %653, %v183
        %v655 = vpop.permute.xlu0 %654
        %vm657 = vcmask 261120
        %v659 = vsel %vm657, %v629, 0
        %v662 = vsel %vm657, %v630, 0
        %v665 = vsel %vm657, %v631, 0
        %v668 = vsel %vm657, %v632, 0
        %670 = vmatprep.subr.mxu0 %v614
        %671 = vmatpush1.msra.mxu0 %v613
        %672 = vmatprep.subr.mxu0 %v618
        %673 = vmatpush1.msra.mxu0 %v617
        %674 = vmatprep.subr.mxu0 %v622
        %675 = vmatpush1.msra.mxu0 %v621
        %676 = vmatprep.subr.mxu0 %v626
        %677 = vmatpush1.msra.mxu0 %v625
        %678 = vmatprep.subr.mxu0 0.0
        %679 = vmatpush1.msra.mxu0 0.0
        %680 = vmatprep.subr.mxu0 0.0
        %681 = vmatpush1.msra.mxu0 0.0
        %682 = vmatprep.subr.mxu0 0.0
        %683 = vmatpush1.msra.mxu0 0.0
        %684 = vmatprep.subr.mxu0 0.0
        %685 = vmatpush1.msra.mxu0 0.0
        %686 = vmatprep.subr.mxu0 0.0
        %687 = vmatpush1.msra.mxu0 0.0
        %688 = vmatprep.subr.mxu0 0.0
        %689 = vmatpush1.msra.mxu0 0.0
        %690 = vmatprep.subr.mxu0 0.0
        %691 = vmatpush1.msra.mxu0 0.0
        %692 = vmatprep.subr.mxu0 0.0
        %693 = vmatpush1.msra.mxu0 0.0
        %694 = vmatprep.subr.mxu0 0.0
        %695 = vmatpush1.msra.mxu0 0.0
        %696 = vmatprep.subr.mxu0 0.0
        %697 = vmatpush1.msra.mxu0 0.0
        %698 = vmatprep.subr.mxu0 0.0
        %699 = vmatpush1.msra.mxu0 0.0
        %700 = vmatprep.subr.mxu0 0.0
        %701 = vmatpush1.msra.mxu0 0.0
        %702 = vmatprep.subr.mxu0 0.0
        %703 = vmatpush1.msra.mxu0 0.0
        %704 = vmatprep.subr.mxu0 0.0
        %705 = vmatpush1.msra.mxu0 0.0
        %706 = vmatprep.subr.mxu0 0.0
        %707 = vmatpush1.msra.mxu0 0.0
        %708 = vmatprep.subr.mxu0 0.0
        %709 = vmatpush1.msra.mxu0 0.0
        %710 = vmatprep.subr.mxu0 0.0
        %711 = vmatpush1.msra.mxu0 0.0
        %712 = vmatprep.subr.mxu0 0.0
        %713 = vmatpush1.msra.mxu0 0.0
        %714 = vmatprep.subr.mxu0 0.0
        %715 = vmatpush1.msra.mxu0 0.0
        %716 = vmatprep.subr.mxu0 0.0
        %717 = vmatpush1.msra.mxu0 0.0
        %718 = vmatprep.subr.mxu0 0.0
        %719 = vmatpush1.msra.mxu0 0.0
        %720 = vmatprep.subr.mxu0 0.0
        %721 = vmatpush1.msra.mxu0 0.0
        %722 = vmatprep.subr.mxu0 0.0
        %723 = vmatpush1.msra.mxu0 0.0
        %724 = vmatprep.subr.mxu0 0.0
        %725 = vmatpush1.msra.mxu0 0.0
        %726 = vmatprep.subr.mxu0 0.0
        %727 = vmatpush1.msra.mxu0 0.0
        %728 = vmatprep.subr.mxu0 0.0
        %729 = vmatpush1.msra.mxu0 0.0
        %730 = vmatprep.subr.mxu0 0.0
        %731 = vmatpush1.msra.mxu0 0.0
        %732 = vmatprep.subr.mxu0 0.0
        %733 = vmatpush1.msra.mxu0 0.0
        %734 = vmatprep.mubr.f32.mxu0 0.0
        %735 = vmatmul.mubr.f32.gmra.mrb[0].mxu0 %v659
        %v736 = vpop.f32.mrb[0].mxu0
        %v737 = vadd.f32 %v643, %v736
        %v738 = vpop.f32.mrb[0].mxu0
        %v739 = vadd.f32 %v643, %v738
        %740 = vmatprep.mubr.f32.mxu0 0.0
        %741 = vmatmul.mubr.f32.gmra.mrb[0].mxu0 %v662
        %v742 = vpop.f32.mrb[0].mxu0
        %v743 = vadd.f32 %v647, %v742
        %v744 = vpop.f32.mrb[0].mxu0
        %v745 = vadd.f32 %v647, %v744
        %746 = vmatprep.mubr.f32.mxu0 0.0
        %747 = vmatmul.mubr.f32.gmra.mrb[0].mxu0 %v665
        %v748 = vpop.f32.mrb[0].mxu0
        %v749 = vadd.f32 %v651, %v748
        %v750 = vpop.f32.mrb[0].mxu0
        %v751 = vadd.f32 %v651, %v750
        %752 = vmatprep.mubr.f32.mxu0 0.0
        %753 = vmatmul.mubr.f32.gmra.mrb[0].mxu0 %v668
        %v754 = vpop.f32.mrb[0].mxu0
        %v755 = vadd.f32 %v655, %v754
        %v756 = vpop.f32.mrb[0].mxu0
        %v757 = vadd.f32 %v655, %v756
        %758 = vdwg.mxu0
        %759 = vmatprep.subr.mxu0 %v616
        %760 = vmatpush1.msra.mxu0 %v615
        %761 = vmatprep.subr.mxu0 %v620
        %762 = vmatpush1.msra.mxu0 %v619
        %763 = vmatprep.subr.mxu0 %v624
        %764 = vmatpush1.msra.mxu0 %v623
        %765 = vmatprep.subr.mxu0 %v628
        %766 = vmatpush1.msra.mxu0 %v627
        %767 = vmatprep.subr.mxu0 0.0
        %768 = vmatpush1.msra.mxu0 0.0
        %769 = vmatprep.subr.mxu0 0.0
        %770 = vmatpush1.msra.mxu0 0.0
        %771 = vmatprep.subr.mxu0 0.0
        %772 = vmatpush1.msra.mxu0 0.0
        %773 = vmatprep.subr.mxu0 0.0
        %774 = vmatpush1.msra.mxu0 0.0
        %775 = vmatprep.subr.mxu0 0.0
        %776 = vmatpush1.msra.mxu0 0.0
        %777 = vmatprep.subr.mxu0 0.0
        %778 = vmatpush1.msra.mxu0 0.0
        %779 = vmatprep.subr.mxu0 0.0
        %780 = vmatpush1.msra.mxu0 0.0
        %781 = vmatprep.subr.mxu0 0.0
        %782 = vmatpush1.msra.mxu0 0.0
        %783 = vmatprep.subr.mxu0 0.0
        %784 = vmatpush1.msra.mxu0 0.0
        %785 = vmatprep.subr.mxu0 0.0
        %786 = vmatpush1.msra.mxu0 0.0
        %787 = vmatprep.subr.mxu0 0.0
        %788 = vmatpush1.msra.mxu0 0.0
        %789 = vmatprep.subr.mxu0 0.0
        %790 = vmatpush1.msra.mxu0 0.0
        %791 = vmatprep.subr.mxu0 0.0
        %792 = vmatpush1.msra.mxu0 0.0
        %793 = vmatprep.subr.mxu0 0.0
        %794 = vmatpush1.msra.mxu0 0.0
        %795 = vmatprep.subr.mxu0 0.0
        %796 = vmatpush1.msra.mxu0 0.0
        %797 = vmatprep.subr.mxu0 0.0
        %798 = vmatpush1.msra.mxu0 0.0
        %799 = vmatprep.subr.mxu0 0.0
        %800 = vmatpush1.msra.mxu0 0.0
        %801 = vmatprep.subr.mxu0 0.0
        %802 = vmatpush1.msra.mxu0 0.0
        %803 = vmatprep.subr.mxu0 0.0
        %804 = vmatpush1.msra.mxu0 0.0
        %805 = vmatprep.subr.mxu0 0.0
        %806 = vmatpush1.msra.mxu0 0.0
        %807 = vmatprep.subr.mxu0 0.0
        %808 = vmatpush1.msra.mxu0 0.0
        %809 = vmatprep.subr.mxu0 0.0
        %810 = vmatpush1.msra.mxu0 0.0
        %811 = vmatprep.subr.mxu0 0.0
        %812 = vmatpush1.msra.mxu0 0.0
        %813 = vmatprep.subr.mxu0 0.0
        %814 = vmatpush1.msra.mxu0 0.0
        %815 = vmatprep.subr.mxu0 0.0
        %816 = vmatpush1.msra.mxu0 0.0
        %817 = vmatprep.subr.mxu0 0.0
        %818 = vmatpush1.msra.mxu0 0.0
        %819 = vmatprep.subr.mxu0 0.0
        %820 = vmatpush1.msra.mxu0 0.0
        %821 = vmatprep.subr.mxu0 0.0
        %822 = vmatpush1.msra.mxu0 0.0
        %823 = vmatprep.mubr.f32.mxu0 0.0
        %824 = vmatmul.mubr.f32.gmra.mrb[0].mxu0 %v659
        %v825 = vpop.f32.mrb[0].mxu0
        %v826 = vadd.f32 %v643, %v825
        %v827 = vpop.f32.mrb[0].mxu0
        %v828 = vadd.f32 %v643, %v827
        %829 = vmatprep.mubr.f32.mxu0 0.0
        %830 = vmatmul.mubr.f32.gmra.mrb[0].mxu0 %v662
        %v831 = vpop.f32.mrb[0].mxu0
        %v832 = vadd.f32 %v647, %v831
        %v833 = vpop.f32.mrb[0].mxu0
        %v834 = vadd.f32 %v647, %v833
        %835 = vmatprep.mubr.f32.mxu0 0.0
        %836 = vmatmul.mubr.f32.gmra.mrb[0].mxu0 %v665
        %v837 = vpop.f32.mrb[0].mxu0
        %v838 = vadd.f32 %v651, %v837
        %v839 = vpop.f32.mrb[0].mxu0
        %v840 = vadd.f32 %v651, %v839
        %841 = vmatprep.mubr.f32.mxu0 0.0
        %842 = vmatmul.mubr.f32.gmra.mrb[0].mxu0 %v668
        %v843 = vpop.f32.mrb[0].mxu0
        %v844 = vadd.f32 %v655, %v843
        %v845 = vpop.f32.mrb[0].mxu0
        %v846 = vadd.f32 %v655, %v845
        %847 = vdwg.mxu0
        %v848 = vmax.f32 %v737, 0.0
        %v849 = vmax.f32 %v739, 0.0
        %v850 = vmax.f32 %v826, 0.0
        %v851 = vmax.f32 %v828, 0.0
        %v852 = vmax.f32 %v743, 0.0
        %v853 = vmax.f32 %v745, 0.0
        %v854 = vmax.f32 %v832, 0.0
        %v855 = vmax.f32 %v834, 0.0
        %v856 = vmax.f32 %v749, 0.0
        %v857 = vmax.f32 %v751, 0.0
        %v858 = vmax.f32 %v838, 0.0
        %v859 = vmax.f32 %v840, 0.0
        %v860 = vmax.f32 %v755, 0.0
        %v861 = vmax.f32 %v757, 0.0
        %v862 = vmax.f32 %v844, 0.0
        %v863 = vmax.f32 %v846, 0.0
        %864 = vset.pattern.permute.xlu0 4
        %865 = vperm.xlu0 %864, %v180
        %v866 = vpop.permute.xlu0 %865
        %868 = vset.pattern.permute.xlu0 4
        %869 = vperm.xlu0 %868, %v181
        %v870 = vpop.permute.xlu0 %869
        %872 = vset.pattern.permute.xlu0 4
        %873 = vperm.xlu0 %872, %v182
        %v874 = vpop.permute.xlu0 %873
        %876 = vset.pattern.permute.xlu0 4
        %877 = vperm.xlu0 %876, %v183
        %v878 = vpop.permute.xlu0 %877
        %v881 = vsel %vm657, %v633, 0
        %v884 = vsel %vm657, %v634, 0
        %v887 = vsel %vm657, %v635, 0
        %v890 = vsel %vm657, %v636, 0
        %892 = vmatprep.subr.mxu0 %v849
        %893 = vmatpush1.msra.mxu0 %v848
        %894 = vmatprep.subr.mxu0 %v853
        %895 = vmatpush1.msra.mxu0 %v852
        %896 = vmatprep.subr.mxu0 %v857
        %897 = vmatpush1.msra.mxu0 %v856
        %898 = vmatprep.subr.mxu0 %v861
        %899 = vmatpush1.msra.mxu0 %v860
        %900 = vmatprep.subr.mxu0 0.0
        %901 = vmatpush1.msra.mxu0 0.0
        %902 = vmatprep.subr.mxu0 0.0
        %903 = vmatpush1.msra.mxu0 0.0
        %904 = vmatprep.subr.mxu0 0.0
        %905 = vmatpush1.msra.mxu0 0.0
        %906 = vmatprep.subr.mxu0 0.0
        %907 = vmatpush1.msra.mxu0 0.0
        %908 = vmatprep.subr.mxu0 0.0
        %909 = vmatpush1.msra.mxu0 0.0
        %910 = vmatprep.subr.mxu0 0.0
        %911 = vmatpush1.msra.mxu0 0.0
        %912 = vmatprep.subr.mxu0 0.0
        %913 = vmatpush1.msra.mxu0 0.0
        %914 = vmatprep.subr.mxu0 0.0
        %915 = vmatpush1.msra.mxu0 0.0
        %916 = vmatprep.subr.mxu0 0.0
        %917 = vmatpush1.msra.mxu0 0.0
        %918 = vmatprep.subr.mxu0 0.0
        %919 = vmatpush1.msra.mxu0 0.0
        %920 = vmatprep.subr.mxu0 0.0
        %921 = vmatpush1.msra.mxu0 0.0
        %922 = vmatprep.subr.mxu0 0.0
        %923 = vmatpush1.msra.mxu0 0.0
        %924 = vmatprep.subr.mxu0 0.0
        %925 = vmatpush1.msra.mxu0 0.0
        %926 = vmatprep.subr.mxu0 0.0
        %927 = vmatpush1.msra.mxu0 0.0
        %928 = vmatprep.subr.mxu0 0.0
        %929 = vmatpush1.msra.mxu0 0.0
        %930 = vmatprep.subr.mxu0 0.0
        %931 = vmatpush1.msra.mxu0 0.0
        %932 = vmatprep.subr.mxu0 0.0
        %933 = vmatpush1.msra.mxu0 0.0
        %934 = vmatprep.subr.mxu0 0.0
        %935 = vmatpush1.msra.mxu0 0.0
        %936 = vmatprep.subr.mxu0 0.0
        %937 = vmatpush1.msra.mxu0 0.0
        %938 = vmatprep.subr.mxu0 0.0
        %939 = vmatpush1.msra.mxu0 0.0
        %940 = vmatprep.subr.mxu0 0.0
        %941 = vmatpush1.msra.mxu0 0.0
        %942 = vmatprep.subr.mxu0 0.0
        %943 = vmatpush1.msra.mxu0 0.0
        %944 = vmatprep.subr.mxu0 0.0
        %945 = vmatpush1.msra.mxu0 0.0
        %946 = vmatprep.subr.mxu0 0.0
        %947 = vmatpush1.msra.mxu0 0.0
        %948 = vmatprep.subr.mxu0 0.0
        %949 = vmatpush1.msra.mxu0 0.0
        %950 = vmatprep.subr.mxu0 0.0
        %951 = vmatpush1.msra.mxu0 0.0
        %952 = vmatprep.subr.mxu0 0.0
        %953 = vmatpush1.msra.mxu0 0.0
        %954 = vmatprep.subr.mxu0 0.0
        %955 = vmatpush1.msra.mxu0 0.0
        %956 = vmatprep.mubr.f32.mxu0 0.0
        %957 = vmatmul.mubr.f32.gmra.mrb[0].mxu0 %v881
        %v958 = vpop.f32.mrb[0].mxu0
        %v959 = vadd.f32 %v866, %v958
        %v960 = vpop.f32.mrb[0].mxu0
        %v961 = vadd.f32 %v866, %v960
        %962 = vmatprep.mubr.f32.mxu0 0.0
        %963 = vmatmul.mubr.f32.gmra.mrb[0].mxu0 %v884
        %v964 = vpop.f32.mrb[0].mxu0
        %v965 = vadd.f32 %v870, %v964
        %v966 = vpop.f32.mrb[0].mxu0
        %v967 = vadd.f32 %v870, %v966
        %968 = vmatprep.mubr.f32.mxu0 0.0
        %969 = vmatmul.mubr.f32.gmra.mrb[0].mxu0 %v887
        %v970 = vpop.f32.mrb[0].mxu0
        %v971 = vadd.f32 %v874, %v970
        %v972 = vpop.f32.mrb[0].mxu0
        %v973 = vadd.f32 %v874, %v972
        %974 = vmatprep.mubr.f32.mxu0 0.0
        %975 = vmatmul.mubr.f32.gmra.mrb[0].mxu0 %v890
        %v976 = vpop.f32.mrb[0].mxu0
        %v977 = vadd.f32 %v878, %v976
        %v978 = vpop.f32.mrb[0].mxu0
        %v979 = vadd.f32 %v878, %v978
        %980 = vdwg.mxu0
        %981 = vmatprep.subr.mxu0 %v851
        %982 = vmatpush1.msra.mxu0 %v850
        %983 = vmatprep.subr.mxu0 %v855
        %984 = vmatpush1.msra.mxu0 %v854
        %985 = vmatprep.subr.mxu0 %v859
        %986 = vmatpush1.msra.mxu0 %v858
        %987 = vmatprep.subr.mxu0 %v863
        %988 = vmatpush1.msra.mxu0 %v862
        %989 = vmatprep.subr.mxu0 0.0
        %990 = vmatpush1.msra.mxu0 0.0
        %991 = vmatprep.subr.mxu0 0.0
        %992 = vmatpush1.msra.mxu0 0.0
        %993 = vmatprep.subr.mxu0 0.0
        %994 = vmatpush1.msra.mxu0 0.0
        %995 = vmatprep.subr.mxu0 0.0
        %996 = vmatpush1.msra.mxu0 0.0
        %997 = vmatprep.subr.mxu0 0.0
        %998 = vmatpush1.msra.mxu0 0.0
        %999 = vmatprep.subr.mxu0 0.0
        %1000 = vmatpush1.msra.mxu0 0.0
        %1001 = vmatprep.subr.mxu0 0.0
        %1002 = vmatpush1.msra.mxu0 0.0
        %1003 = vmatprep.subr.mxu0 0.0
        %1004 = vmatpush1.msra.mxu0 0.0
        %1005 = vmatprep.subr.mxu0 0.0
        %1006 = vmatpush1.msra.mxu0 0.0
        %1007 = vmatprep.subr.mxu0 0.0
        %1008 = vmatpush1.msra.mxu0 0.0
        %1009 = vmatprep.subr.mxu0 0.0
        %1010 = vmatpush1.msra.mxu0 0.0
        %1011 = vmatprep.subr.mxu0 0.0
        %1012 = vmatpush1.msra.mxu0 0.0
        %1013 = vmatprep.subr.mxu0 0.0
        %1014 = vmatpush1.msra.mxu0 0.0
        %1015 = vmatprep.subr.mxu0 0.0
        %1016 = vmatpush1.msra.mxu0 0.0
        %1017 = vmatprep.subr.mxu0 0.0
        %1018 = vmatpush1.msra.mxu0 0.0
        %1019 = vmatprep.subr.mxu0 0.0
        %1020 = vmatpush1.msra.mxu0 0.0
        %1021 = vmatprep.subr.mxu0 0.0
        %1022 = vmatpush1.msra.mxu0 0.0
        %1023 = vmatprep.subr.mxu0 0.0
        %1024 = vmatpush1.msra.mxu0 0.0
        %1025 = vmatprep.subr.mxu0 0.0
        %1026 = vmatpush1.msra.mxu0 0.0
        %1027 = vmatprep.subr.mxu0 0.0
        %1028 = vmatpush1.msra.mxu0 0.0
        %1029 = vmatprep.subr.mxu0 0.0
        %1030 = vmatpush1.msra.mxu0 0.0
        %1031 = vmatprep.subr.mxu0 0.0
        %1032 = vmatpush1.msra.mxu0 0.0
        %1033 = vmatprep.subr.mxu0 0.0
        %1034 = vmatpush1.msra.mxu0 0.0
        %1035 = vmatprep.subr.mxu0 0.0
        %1036 = vmatpush1.msra.mxu0 0.0
        %1037 = vmatprep.subr.mxu0 0.0
        %1038 = vmatpush1.msra.mxu0 0.0
        %1039 = vmatprep.subr.mxu0 0.0
        %1040 = vmatpush1.msra.mxu0 0.0
        %1041 = vmatprep.subr.mxu0 0.0
        %1042 = vmatpush1.msra.mxu0 0.0
        %1043 = vmatprep.subr.mxu0 0.0
        %1044 = vmatpush1.msra.mxu0 0.0
        %1045 = vmatprep.mubr.f32.mxu0 0.0
        %1046 = vmatmul.mubr.f32.gmra.mrb[0].mxu0 %v881
        %v1047 = vpop.f32.mrb[0].mxu0
        %v1048 = vadd.f32 %v866, %v1047
        %v1049 = vpop.f32.mrb[0].mxu0
        %v1050 = vadd.f32 %v866, %v1049
        %1051 = vmatprep.mubr.f32.mxu0 0.0
        %1052 = vmatmul.mubr.f32.gmra.mrb[0].mxu0 %v884
        %v1053 = vpop.f32.mrb[0].mxu0
        %v1054 = vadd.f32 %v870, %v1053
        %v1055 = vpop.f32.mrb[0].mxu0
        %v1056 = vadd.f32 %v870, %v1055
        %1057 = vmatprep.mubr.f32.mxu0 0.0
        %1058 = vmatmul.mubr.f32.gmra.mrb[0].mxu0 %v887
        %v1059 = vpop.f32.mrb[0].mxu0
        %v1060 = vadd.f32 %v874, %v1059
        %v1061 = vpop.f32.mrb[0].mxu0
        %v1062 = vadd.f32 %v874, %v1061
        %1063 = vmatprep.mubr.f32.mxu0 0.0
        %1064 = vmatmul.mubr.f32.gmra.mrb[0].mxu0 %v890
        %v1065 = vpop.f32.mrb[0].mxu0
        %v1066 = vadd.f32 %v878, %v1065
        %v1067 = vpop.f32.mrb[0].mxu0
        %v1068 = vadd.f32 %v878, %v1067
        %1069 = vdwg.mxu0
        %v1070 = vmax.f32 %v959, 0.0
        %v1071 = vmax.f32 %v961, 0.0
        %v1072 = vmax.f32 %v1048, 0.0
        %v1073 = vmax.f32 %v1050, 0.0
        %v1074 = vmax.f32 %v965, 0.0
        %v1075 = vmax.f32 %v967, 0.0
        %v1076 = vmax.f32 %v1054, 0.0
        %v1077 = vmax.f32 %v1056, 0.0
        %v1078 = vmax.f32 %v971, 0.0
        %v1079 = vmax.f32 %v973, 0.0
        %v1080 = vmax.f32 %v1060, 0.0
        %v1081 = vmax.f32 %v1062, 0.0
        %v1082 = vmax.f32 %v977, 0.0
        %v1083 = vmax.f32 %v979, 0.0
        %v1084 = vmax.f32 %v1066, 0.0
        %v1085 = vmax.f32 %v1068, 0.0
        %1086 = vset.pattern.permute.xlu0 5
        %1087 = vperm.xlu0 %1086, %v180
        %v1088 = vpop.permute.xlu0 %1087
        %1090 = vset.pattern.permute.xlu0 5
        %1091 = vperm.xlu0 %1090, %v181
        %v1092 = vpop.permute.xlu0 %1091
        %v1095 = vsel %vm657, %v637, 0
        %v1098 = vsel %vm657, %v638, 0
        %1100 = vmatprep.subr.mxu0 %v1071
        %1101 = vmatpush1.msra.mxu0 %v1070
        %1102 = vmatprep.subr.mxu0 %v1075
        %1103 = vmatpush1.msra.mxu0 %v1074
        %1104 = vmatprep.subr.mxu0 %v1079
        %1105 = vmatpush1.msra.mxu0 %v1078
        %1106 = vmatprep.subr.mxu0 %v1083
        %1107 = vmatpush1.msra.mxu0 %v1082
        %1108 = vmatprep.subr.mxu0 0.0
        %1109 = vmatpush1.msra.mxu0 0.0
        %1110 = vmatprep.subr.mxu0 0.0
        %1111 = vmatpush1.msra.mxu0 0.0
        %1112 = vmatprep.subr.mxu0 0.0
        %1113 = vmatpush1.msra.mxu0 0.0
        %1114 = vmatprep.subr.mxu0 0.0
        %1115 = vmatpush1.msra.mxu0 0.0
        %1116 = vmatprep.subr.mxu0 0.0
        %1117 = vmatpush1.msra.mxu0 0.0
        %1118 = vmatprep.subr.mxu0 0.0
        %1119 = vmatpush1.msra.mxu0 0.0
        %1120 = vmatprep.subr.mxu0 0.0
        %1121 = vmatpush1.msra.mxu0 0.0
        %1122 = vmatprep.subr.mxu0 0.0
        %1123 = vmatpush1.msra.mxu0 0.0
        %1124 = vmatprep.subr.mxu0 0.0
        %1125 = vmatpush1.msra.mxu0 0.0
        %1126 = vmatprep.subr.mxu0 0.0
        %1127 = vmatpush1.msra.mxu0 0.0
        %1128 = vmatprep.subr.mxu0 0.0
        %1129 = vmatpush1.msra.mxu0 0.0
        %1130 = vmatprep.subr.mxu0 0.0
        %1131 = vmatpush1.msra.mxu0 0.0
        %1132 = vmatprep.subr.mxu0 0.0
        %1133 = vmatpush1.msra.mxu0 0.0
        %1134 = vmatprep.subr.mxu0 0.0
        %1135 = vmatpush1.msra.mxu0 0.0
        %1136 = vmatprep.subr.mxu0 0.0
        %1137 = vmatpush1.msra.mxu0 0.0
        %1138 = vmatprep.subr.mxu0 0.0
        %1139 = vmatpush1.msra.mxu0 0.0
        %1140 = vmatprep.subr.mxu0 0.0
        %1141 = vmatpush1.msra.mxu0 0.0
        %1142 = vmatprep.subr.mxu0 0.0
        %1143 = vmatpush1.msra.mxu0 0.0
        %1144 = vmatprep.subr.mxu0 0.0
        %1145 = vmatpush1.msra.mxu0 0.0
        %1146 = vmatprep.subr.mxu0 0.0
        %1147 = vmatpush1.msra.mxu0 0.0
        %1148 = vmatprep.subr.mxu0 0.0
        %1149 = vmatpush1.msra.mxu0 0.0
        %1150 = vmatprep.subr.mxu0 0.0
        %1151 = vmatpush1.msra.mxu0 0.0
        %1152 = vmatprep.subr.mxu0 0.0
        %1153 = vmatpush1.msra.mxu0 0.0
        %1154 = vmatprep.subr.mxu0 0.0
        %1155 = vmatpush1.msra.mxu0 0.0
        %1156 = vmatprep.subr.mxu0 0.0
        %1157 = vmatpush1.msra.mxu0 0.0
        %1158 = vmatprep.subr.mxu0 0.0
        %1159 = vmatpush1.msra.mxu0 0.0
        %1160 = vmatprep.subr.mxu0 0.0
        %1161 = vmatpush1.msra.mxu0 0.0
        %1162 = vmatprep.subr.mxu0 0.0
        %1163 = vmatpush1.msra.mxu0 0.0
        %1164 = vmatprep.mubr.f32.mxu0 0.0
        %1165 = vmatmul.mubr.f32.gmra.mrb[0].mxu0 %v1095
        %v1166 = vpop.f32.mrb[0].mxu0
        %v1167 = vadd.f32 %v1088, %v1166
        %v1168 = vpop.f32.mrb[0].mxu0
        %v1169 = vadd.f32 %v1088, %v1168
        %1170 = vmatprep.mubr.f32.mxu0 0.0
        %1171 = vmatmul.mubr.f32.gmra.mrb[0].mxu0 %v1098
        %v1172 = vpop.f32.mrb[0].mxu0
        %v1173 = vadd.f32 %v1092, %v1172
        %v1174 = vpop.f32.mrb[0].mxu0
        %v1175 = vadd.f32 %v1092, %v1174
        %1176 = vdwg.mxu0
        %1177 = vmatprep.subr.mxu0 %v1073
        %1178 = vmatpush1.msra.mxu0 %v1072
        %1179 = vmatprep.subr.mxu0 %v1077
        %1180 = vmatpush1.msra.mxu0 %v1076
        %1181 = vmatprep.subr.mxu0 %v1081
        %1182 = vmatpush1.msra.mxu0 %v1080
        %1183 = vmatprep.subr.mxu0 %v1085
        %1184 = vmatpush1.msra.mxu0 %v1084
        %1185 = vmatprep.subr.mxu0 0.0
        %1186 = vmatpush1.msra.mxu0 0.0
        %1187 = vmatprep.subr.mxu0 0.0
        %1188 = vmatpush1.msra.mxu0 0.0
        %1189 = vmatprep.subr.mxu0 0.0
        %1190 = vmatpush1.msra.mxu0 0.0
        %1191 = vmatprep.subr.mxu0 0.0
        %1192 = vmatpush1.msra.mxu0 0.0
        %1193 = vmatprep.subr.mxu0 0.0
        %1194 = vmatpush1.msra.mxu0 0.0
        %1195 = vmatprep.subr.mxu0 0.0
        %1196 = vmatpush1.msra.mxu0 0.0
        %1197 = vmatprep.subr.mxu0 0.0
        %1198 = vmatpush1.msra.mxu0 0.0
        %1199 = vmatprep.subr.mxu0 0.0
        %1200 = vmatpush1.msra.mxu0 0.0
        %1201 = vmatprep.subr.mxu0 0.0
        %1202 = vmatpush1.msra.mxu0 0.0
        %1203 = vmatprep.subr.mxu0 0.0
        %1204 = vmatpush1.msra.mxu0 0.0
        %1205 = vmatprep.subr.mxu0 0.0
        %1206 = vmatpush1.msra.mxu0 0.0
        %1207 = vmatprep.subr.mxu0 0.0
        %1208 = vmatpush1.msra.mxu0 0.0
        %1209 = vmatprep.subr.mxu0 0.0
        %1210 = vmatpush1.msra.mxu0 0.0
        %1211 = vmatprep.subr.mxu0 0.0
        %1212 = vmatpush1.msra.mxu0 0.0
        %1213 = vmatprep.subr.mxu0 0.0
        %1214 = vmatpush1.msra.mxu0 0.0
        %1215 = vmatprep.subr.mxu0 0.0
        %1216 = vmatpush1.msra.mxu0 0.0
        %1217 = vmatprep.subr.mxu0 0.0
        %1218 = vmatpush1.msra.mxu0 0.0
        %1219 = vmatprep.subr.mxu0 0.0
        %1220 = vmatpush1.msra.mxu0 0.0
        %1221 = vmatprep.subr.mxu0 0.0
        %1222 = vmatpush1.msra.mxu0 0.0
        %1223 = vmatprep.subr.mxu0 0.0
        %1224 = vmatpush1.msra.mxu0 0.0
        %1225 = vmatprep.subr.mxu0 0.0
        %1226 = vmatpush1.msra.mxu0 0.0
        %1227 = vmatprep.subr.mxu0 0.0
        %1228 = vmatpush1.msra.mxu0 0.0
        %1229 = vmatprep.subr.mxu0 0.0
        %1230 = vmatpush1.msra.mxu0 0.0
        %1231 = vmatprep.subr.mxu0 0.0
        %1232 = vmatpush1.msra.mxu0 0.0
        %1233 = vmatprep.subr.mxu0 0.0
        %1234 = vmatpush1.msra.mxu0 0.0
        %1235 = vmatprep.subr.mxu0 0.0
        %1236 = vmatpush1.msra.mxu0 0.0
        %1237 = vmatprep.subr.mxu0 0.0
        %1238 = vmatpush1.msra.mxu0 0.0
        %1239 = vmatprep.subr.mxu0 0.0
        %1240 = vmatpush1.msra.mxu0 0.0
        %1241 = vmatprep.mubr.f32.mxu0 0.0
        %1242 = vmatmul.mubr.f32.gmra.mrb[0].mxu0 %v1095
        %v1243 = vpop.f32.mrb[0].mxu0
        %v1244 = vadd.f32 %v1088, %v1243
        %v1245 = vpop.f32.mrb[0].mxu0
        %v1246 = vadd.f32 %v1088, %v1245
        %1247 = vmatprep.mubr.f32.mxu0 0.0
        %1248 = vmatmul.mubr.f32.gmra.mrb[0].mxu0 %v1098
        %v1249 = vpop.f32.mrb[0].mxu0
        %v1250 = vadd.f32 %v1092, %v1249
        %v1251 = vpop.f32.mrb[0].mxu0
        %v1252 = vadd.f32 %v1092, %v1251
        %1253 = vdwg.mxu0
        %v1254 = vmax.f32 %v1167, 0.0
        %v1255 = vmax.f32 %v1169, 0.0
        %v1256 = vmax.f32 %v1244, 0.0
        %v1257 = vmax.f32 %v1246, 0.0
        %v1258 = vmax.f32 %v1173, 0.0
        %v1259 = vmax.f32 %v1175, 0.0
        %v1260 = vmax.f32 %v1250, 0.0
        %v1261 = vmax.f32 %v1252, 0.0
        %1262 = vset.pattern.permute.xlu0 6
        %1263 = vperm.xlu0 %1262, %v180
        %v1264 = vpop.permute.xlu0 %1263
        %1266 = vset.pattern.permute.xlu0 6
        %1267 = vperm.xlu0 %1266, %v181
        %v1268 = vpop.permute.xlu0 %1267
        %vm1270 = vcmask 130048
        %v1272 = vsel %vm1270, %v639, 0
        %v1275 = vsel %vm1270, %v640, 0
        %1277 = vmatprep.subr.mxu0 %v1255
        %1278 = vmatpush1.msra.mxu0 %v1254
        %1279 = vmatprep.subr.mxu0 %v1259
        %1280 = vmatpush1.msra.mxu0 %v1258
        %1281 = vmatprep.subr.mxu0 0.0
        %1282 = vmatpush1.msra.mxu0 0.0
        %1283 = vmatprep.subr.mxu0 0.0
        %1284 = vmatpush1.msra.mxu0 0.0
        %1285 = vmatprep.subr.mxu0 0.0
        %1286 = vmatpush1.msra.mxu0 0.0
        %1287 = vmatprep.subr.mxu0 0.0
        %1288 = vmatpush1.msra.mxu0 0.0
        %1289 = vmatprep.subr.mxu0 0.0
        %1290 = vmatpush1.msra.mxu0 0.0
        %1291 = vmatprep.subr.mxu0 0.0
        %1292 = vmatpush1.msra.mxu0 0.0
        %1293 = vmatprep.subr.mxu0 0.0
        %1294 = vmatpush1.msra.mxu0 0.0
        %1295 = vmatprep.subr.mxu0 0.0
        %1296 = vmatpush1.msra.mxu0 0.0
        %1297 = vmatprep.subr.mxu0 0.0
        %1298 = vmatpush1.msra.mxu0 0.0
        %1299 = vmatprep.subr.mxu0 0.0
        %1300 = vmatpush1.msra.mxu0 0.0
        %1301 = vmatprep.subr.mxu0 0.0
        %1302 = vmatpush1.msra.mxu0 0.0
        %1303 = vmatprep.subr.mxu0 0.0
        %1304 = vmatpush1.msra.mxu0 0.0
        %1305 = vmatprep.subr.mxu0 0.0
        %1306 = vmatpush1.msra.mxu0 0.0
        %1307 = vmatprep.subr.mxu0 0.0
        %1308 = vmatpush1.msra.mxu0 0.0
        %1309 = vmatprep.subr.mxu0 0.0
        %1310 = vmatpush1.msra.mxu0 0.0
        %1311 = vmatprep.subr.mxu0 0.0
        %1312 = vmatpush1.msra.mxu0 0.0
        %1313 = vmatprep.subr.mxu0 0.0
        %1314 = vmatpush1.msra.mxu0 0.0
        %1315 = vmatprep.subr.mxu0 0.0
        %1316 = vmatpush1.msra.mxu0 0.0
        %1317 = vmatprep.subr.mxu0 0.0
        %1318 = vmatpush1.msra.mxu0 0.0
        %1319 = vmatprep.subr.mxu0 0.0
        %1320 = vmatpush1.msra.mxu0 0.0
        %1321 = vmatprep.subr.mxu0 0.0
        %1322 = vmatpush1.msra.mxu0 0.0
        %1323 = vmatprep.subr.mxu0 0.0
        %1324 = vmatpush1.msra.mxu0 0.0
        %1325 = vmatprep.subr.mxu0 0.0
        %1326 = vmatpush1.msra.mxu0 0.0
        %1327 = vmatprep.subr.mxu0 0.0
        %1328 = vmatpush1.msra.mxu0 0.0
        %1329 = vmatprep.subr.mxu0 0.0
        %1330 = vmatpush1.msra.mxu0 0.0
        %1331 = vmatprep.subr.mxu0 0.0
        %1332 = vmatpush1.msra.mxu0 0.0
        %1333 = vmatprep.subr.mxu0 0.0
        %1334 = vmatpush1.msra.mxu0 0.0
        %1335 = vmatprep.subr.mxu0 0.0
        %1336 = vmatpush1.msra.mxu0 0.0
        %1337 = vmatprep.subr.mxu0 0.0
        %1338 = vmatpush1.msra.mxu0 0.0
        %1339 = vmatprep.subr.mxu0 0.0
        %1340 = vmatpush1.msra.mxu0 0.0
        %1341 = vmatprep.mubr.f32.mxu0 0.0
        %1342 = vmatmul.mubr.f32.gmra.mrb[0].mxu0 %v1272
        %v1343 = vpop.f32.mrb[0].mxu0
        %v1344 = vadd.f32 %v1264, %v1343
        %v1345 = vpop.f32.mrb[0].mxu0
        %v1346 = vadd.f32 %v1264, %v1345
        %1347 = vmatprep.mubr.f32.mxu0 0.0
        %1348 = vmatmul.mubr.f32.gmra.mrb[0].mxu0 %v1275
        %v1349 = vpop.f32.mrb[0].mxu0
        %v1350 = vadd.f32 %v1268, %v1349
        %v1351 = vpop.f32.mrb[0].mxu0
        %v1352 = vadd.f32 %v1268, %v1351
        %1353 = vdwg.mxu0
        %1354 = vmatprep.subr.mxu0 %v1257
        %1355 = vmatpush1.msra.mxu0 %v1256
        %1356 = vmatprep.subr.mxu0 %v1261
        %1357 = vmatpush1.msra.mxu0 %v1260
        %1358 = vmatprep.subr.mxu0 0.0
        %1359 = vmatpush1.msra.mxu0 0.0
        %1360 = vmatprep.subr.mxu0 0.0
        %1361 = vmatpush1.msra.mxu0 0.0
        %1362 = vmatprep.subr.mxu0 0.0
        %1363 = vmatpush1.msra.mxu0 0.0
        %1364 = vmatprep.subr.mxu0 0.0
        %1365 = vmatpush1.msra.mxu0 0.0
        %1366 = vmatprep.subr.mxu0 0.0
        %1367 = vmatpush1.msra.mxu0 0.0
        %1368 = vmatprep.subr.mxu0 0.0
        %1369 = vmatpush1.msra.mxu0 0.0
        %1370 = vmatprep.subr.mxu0 0.0
        %1371 = vmatpush1.msra.mxu0 0.0
        %1372 = vmatprep.subr.mxu0 0.0
        %1373 = vmatpush1.msra.mxu0 0.0
        %1374 = vmatprep.subr.mxu0 0.0
        %1375 = vmatpush1.msra.mxu0 0.0
        %1376 = vmatprep.subr.mxu0 0.0
        %1377 = vmatpush1.msra.mxu0 0.0
        %1378 = vmatprep.subr.mxu0 0.0
        %1379 = vmatpush1.msra.mxu0 0.0
        %1380 = vmatprep.subr.mxu0 0.0
        %1381 = vmatpush1.msra.mxu0 0.0
        %1382 = vmatprep.subr.mxu0 0.0
        %1383 = vmatpush1.msra.mxu0 0.0
        %1384 = vmatprep.subr.mxu0 0.0
        %1385 = vmatpush1.msra.mxu0 0.0
        %1386 = vmatprep.subr.mxu0 0.0
        %1387 = vmatpush1.msra.mxu0 0.0
        %1388 = vmatprep.subr.mxu0 0.0
        %1389 = vmatpush1.msra.mxu0 0.0
        %1390 = vmatprep.subr.mxu0 0.0
        %1391 = vmatpush1.msra.mxu0 0.0
        %1392 = vmatprep.subr.mxu0 0.0
        %1393 = vmatpush1.msra.mxu0 0.0
        %1394 = vmatprep.subr.mxu0 0.0
        %1395 = vmatpush1.msra.mxu0 0.0
        %1396 = vmatprep.subr.mxu0 0.0
        %1397 = vmatpush1.msra.mxu0 0.0
        %1398 = vmatprep.subr.mxu0 0.0
        %1399 = vmatpush1.msra.mxu0 0.0
        %1400 = vmatprep.subr.mxu0 0.0
        %1401 = vmatpush1.msra.mxu0 0.0
        %1402 = vmatprep.subr.mxu0 0.0
        %1403 = vmatpush1.msra.mxu0 0.0
        %1404 = vmatprep.subr.mxu0 0.0
        %1405 = vmatpush1.msra.mxu0 0.0
        %1406 = vmatprep.subr.mxu0 0.0
        %1407 = vmatpush1.msra.mxu0 0.0
        %1408 = vmatprep.subr.mxu0 0.0
        %1409 = vmatpush1.msra.mxu0 0.0
        %1410 = vmatprep.subr.mxu0 0.0
        %1411 = vmatpush1.msra.mxu0 0.0
        %1412 = vmatprep.subr.mxu0 0.0
        %1413 = vmatpush1.msra.mxu0 0.0
        %1414 = vmatprep.subr.mxu0 0.0
        %1415 = vmatpush1.msra.mxu0 0.0
        %1416 = vmatprep.subr.mxu0 0.0
        %1417 = vmatpush1.msra.mxu0 0.0
        %1418 = vmatprep.mubr.f32.mxu0 0.0
        %1419 = vmatmul.mubr.f32.gmra.mrb[0].mxu0 %v1272
        %v1420 = vpop.f32.mrb[0].mxu0
        %v1421 = vadd.f32 %v1264, %v1420
        %v1422 = vpop.f32.mrb[0].mxu0
        %v1423 = vadd.f32 %v1264, %v1422
        %1424 = vmatprep.mubr.f32.mxu0 0.0
        %1425 = vmatmul.mubr.f32.gmra.mrb[0].mxu0 %v1275
        %v1426 = vpop.f32.mrb[0].mxu0
        %v1427 = vadd.f32 %v1268, %v1426
        %v1428 = vpop.f32.mrb[0].mxu0
        %v1429 = vadd.f32 %v1268, %v1428
        %1430 = vdwg.mxu0
        %v1431 = vmax.f32 %v1344, 0.0
        %v1432 = vmax.f32 %v1346, 0.0
        %v1433 = vmax.f32 %v1421, 0.0
        %v1434 = vmax.f32 %v1423, 0.0
        %v1435 = vmax.f32 %v1350, 0.0
        %v1436 = vmax.f32 %v1352, 0.0
        %v1437 = vmax.f32 %v1427, 0.0
        %v1438 = vmax.f32 %v1429, 0.0
        %1439 = vset.pattern.permute.xlu0 7
        %1440 = vperm.xlu0 %1439, %v180
        %v1441 = vpop.permute.xlu0 %1440
        %1443 = vset.pattern.permute.xlu0 7
        %1444 = vperm.xlu0 %1443, %v181
        %v1445 = vpop.permute.xlu0 %1444
        %v1447 = vmul.f32 %v1431, %v1441
        %v1448 = vmul.f32 %v1432, %v1441
        %v1449 = vmul.f32 %v1433, %v1441
        %v1450 = vmul.f32 %v1434, %v1441
        %v1451 = vmul.f32 %v1435, %v1445
        %v1452 = vmul.f32 %v1436, %v1445
        %v1453 = vmul.f32 %v1437, %v1445
        %v1454 = vmul.f32 %v1438, %v1445
        %v1455 = vadd.f32 %v1447, %v1451
        %v1456 = vrot.slane %v1455, 4
        %v1457 = vadd.f32 %v1455, %v1456
        %v1458 = vrot.slane %v1457, 2
        %v1459 = vadd.f32 %v1457, %v1458
        %v1460 = vrot.slane %v1459, 1
        %v1461 = vadd.f32 %v1459, %v1460
        %v1462 = vadd.f32 %v1448, %v1452
        %v1463 = vrot.slane %v1462, 4
        %v1464 = vadd.f32 %v1462, %v1463
        %v1465 = vrot.slane %v1464, 2
        %v1466 = vadd.f32 %v1464, %v1465
        %v1467 = vrot.slane %v1466, 1
        %v1468 = vadd.f32 %v1466, %v1467
        %v1469 = vadd.f32 %v1449, %v1453
        %v1470 = vrot.slane %v1469, 4
        %v1471 = vadd.f32 %v1469, %v1470
        %v1472 = vrot.slane %v1471, 2
        %v1473 = vadd.f32 %v1471, %v1472
        %v1474 = vrot.slane %v1473, 1
        %v1475 = vadd.f32 %v1473, %v1474
        %v1476 = vadd.f32 %v1450, %v1454
        %v1477 = vrot.slane %v1476, 4
        %v1478 = vadd.f32 %v1476, %v1477
        %v1479 = vrot.slane %v1478, 2
        %v1480 = vadd.f32 %v1478, %v1479
        %v1481 = vrot.slane %v1480, 1
        %v1482 = vadd.f32 %v1480, %v1481
        %1483 = vset.pattern.permute.xlu0 8
        %1484 = vperm.xlu0 %1483, %v180
        %v1485 = vpop.permute.xlu0 %1484
        %v1487 = vadd.f32 %v1461, %v1485
        %v1488 = vadd.f32 %v1468, %v1485
        %v1489 = vadd.f32 %v1475, %v1485
        %v1490 = vadd.f32 %v1482, %v1485
        %v1491 = vxor.u32 %v1487, 2147483648
        %v1492 = vxor.u32 %v1488, 2147483648
        %v1493 = vxor.u32 %v1489, 2147483648
        %v1494 = vxor.u32 %v1490, 2147483648
        %v1495 = vmul.f32 %v1491, 1.442695
        %v1496 = vpow.pop %v1495
        %v1497 = vmul.f32 %v1492, 1.442695
        %v1498 = vpow.pop %v1497
        %v1499 = vmul.f32 %v1493, 1.442695
        %v1500 = vpow.pop %v1499
        %v1501 = vmul.f32 %v1494, 1.442695
        %v1502 = vpow.pop %v1501
        %v1503 = vadd.f32 %v1496, 1.0
        %v1504 = vadd.f32 %v1498, 1.0
        %v1505 = vadd.f32 %v1500, 1.0
        %v1506 = vadd.f32 %v1502, 1.0
        %v1507 = vrcp.pop %v1503
        %v1508 = vmul.f32 1.0, %v1507
        %v1509 = vrcp.pop %v1504
        %v1510 = vmul.f32 1.0, %v1509
        %v1511 = vrcp.pop %v1505
        %v1512 = vmul.f32 1.0, %v1511
        %v1513 = vrcp.pop %v1506
        %v1514 = vmul.f32 1.0, %v1513
        %v1515 = vlaneseq
        %v1516 = vshrl.u32 %v1515, 7
        %v1517 = vsub.s32 0, %v1516
        %v1518 = vrot.slane %v1508, %v1517
        %v1519 = vlaneseq
        %v1520 = vshrl.u32 %v1519, 7
        %v1521 = vsub.s32 0, %v1520
        %v1522 = vrot.slane %v1510, %v1521
        %v1523 = vlaneseq
        %v1524 = vshrl.u32 %v1523, 7
        %v1525 = vsub.s32 0, %v1524
        %v1526 = vrot.slane %v1512, %v1525
        %v1527 = vlaneseq
        %v1528 = vshrl.u32 %v1527, 7
        %v1529 = vsub.s32 0, %v1528
        %v1530 = vrot.slane %v1514, %v1529
        %v1531 = vmul.f32 %v1254, %v1518
        %v1532 = vmul.f32 %v1255, %v1522
        %v1533 = vmul.f32 %v1256, %v1526
        %v1534 = vmul.f32 %v1257, %v1530
        %v1535 = vmul.f32 %v1258, %v1518
        %v1536 = vmul.f32 %v1259, %v1522
        %v1537 = vmul.f32 %v1260, %v1526
        %v1538 = vmul.f32 %v1261, %v1530
        %1539 = vst [vmem:[%s164] sm:$0xff] %v1531
        %1540 = vst [vmem:[%s164 + $0x8] sm:$0xff] %v1532
        %1541 = vst [vmem:[%s164 + $0x10] sm:$0xff] %v1533
        %1542 = vst [vmem:[%s164 + $0x18] sm:$0xff] %v1534
        %1543 = vst [vmem:[%s164 + $0x20] sm:$0xff] %v1535
        %1544 = vst [vmem:[%s164 + $0x28] sm:$0xff] %v1536
        %1545 = vst [vmem:[%s164 + $0x30] sm:$0xff] %v1537
        %1546 = vst [vmem:[%s164 + $0x38] sm:$0xff] %v1538
        %s1547 = sand.u32 %s93, 1
        %s1548 = scalar_lea.sflag [#allocation3], %s1547
        %s1549 = sand.u32 %s93, 1
        %s1550 = smul.addr %s1549, 64
        %s1551 = scalar_lea.vmem [#allocation2], %s1550
        // Predicated region
        $region33: #{tpu_custom_call.1} parent=31 // pred_check
          %p1552 = pneg %p103
        $region34: #{tpu_custom_call.1} parent=31 // pred_check_branch
          %1554 = sbr.rel (%p1552) target = $region36
        $region35: #{tpu_custom_call.1} parent=31 // pred_region
          %s1555 = smul.u32 4, %s17
          %s1557 = ssub.s32 1024, 1024
          %1558 = vsyncadd %s1548, %s1557
          %s1559 = smul.addr %s1555, 128
          %s1560 = scalar_lea.hbm %s3, %s1559
          %s1561 = sshll.u32 %s1551, 4
          %s1562 = int_to_ptr.vmem [resolvable:$true] %s1561
          %1567 = dma.vmem_to_hbm [thread:$0]  %s1562, 1024, %s1560, %s1548, 512, 1024, 32
        $region36: #{tpu_custom_call.1} parent=31 // pred_fallthru
          _
      $region32: #{tpu_custom_call.1} parent=5 // pred_fallthru
        _
      %p1568 = scmp.le.s32.totalorder 2, %s12
      // Predicated region
      $region37: #{tpu_custom_call.1} parent=5 // pred_check
        %p1569 = pneg %p1568
      $region38: #{tpu_custom_call.1} parent=5 // pred_check_branch
        %1571 = sbr.rel (%p1569) target = $region40
      $region39: #{tpu_custom_call.1} parent=5 // pred_region
        %s1572 = ssub.s32 %s12, 2
        // Predicated region
        $region41: #{tpu_custom_call.1} parent=39 // pred_check
          %p1573 = pneg %p109
        $region42: #{tpu_custom_call.1} parent=39 // pred_check_branch
          %1575 = sbr.rel (%p1573) target = $region44
        $region43: #{tpu_custom_call.1} parent=39 // pred_region
          %s1576 = sand.u32 %s94, 1
          %s1577 = scalar_lea.sflag [#allocation3], %s1576
          %s1578 = sand.u32 %s94, 1
          %s1579 = smul.addr %s1578, 64
          %s1580 = scalar_lea.vmem [#allocation2], %s1579
          %1581 = dma.done %s1577, 1024
        $region44: #{tpu_custom_call.1} parent=39 // pred_fallthru
          _
      $region40: #{tpu_custom_call.1} parent=5 // pred_fallthru
        _
    $region6: #{tpu_custom_call.1} parent=1 // loop_footer
      %s16 = sadd.s32 1, %s12
    $region7: #{tpu_custom_call.1} parent=1 // loop_footer_branch
      %11 = sbr.rel target = $region3
    $region8: #{tpu_custom_call.1} parent=1 // loop_exit
      _
    %1582 = vsyncpa [#allocation3], 1
    %s1583 = scalar_lea.sflag [#allocation3], 1
    %1584 = vsyncpa %s1583, 1

</llo_original>
